<compile_context>
chip_gen: v7x
topology: tpu7x:2x2x1
jax: 0.10.0
libtpu: 0.0.40
codegen_flags: <defaults>
</compile_context>

<pallas_src>
import functools
import math

import jax
import jax.numpy as jnp
from jax.experimental import pallas as pl
from jax.experimental.pallas import tpu as pltpu

EPS = 1e-5                      # BatchNorm2d / InstanceNorm2d default eps
STREAM_DTYPE = jnp.bfloat16     # HBM storage dtype for intermediates (math is f32)
CONV_TILE_CAP = 8192            # max lanes per conv row tile
RESID_TILE_CAP = 2048           # max lanes per fused-residual tile


def _vmem_limit_bytes():
    """Per-generation scoped-VMEM budget: 32 MiB on 64-MiB parts (v7x), 64 MiB on 128-MiB parts."""
    try:
        cap = int(pltpu.get_tpu_info().vmem_capacity_bytes)
    except Exception:
        cap = 64 * 1024 * 1024
    return min(max(cap // 2, 16 * 1024 * 1024), 64 * 1024 * 1024)


VMEM_LIMIT = _vmem_limit_bytes()


def _buffered_spec(block_shape, index_map, depth):
    """BlockSpec with requested pipeline depth; plain spec if not needed/supported."""
    if depth > 2:
        try:
            return pl.BlockSpec(block_shape, index_map, pipeline_mode=pl.Buffered(depth))
        except Exception:
            pass
    return pl.BlockSpec(block_shape, index_map)


def _pick_row_tile(n_images, hw, cap_elems):
    """Largest tile = g*hw with g | n_images, tile % 128 == 0 and tile <= cap."""
    unit = 128 // math.gcd(hw, 128)
    best = 0
    g = unit
    while g <= n_images and g * hw <= cap_elems:
        if n_images % g == 0:
            best = g
        g += unit
    if best:
        return best * hw
    # TODO(synk): pad rows to a 128-aligned tile for large non-factorable batches
    # instead of this single-block fallback.
    return n_images * hw


# ---------------------------------------------------------------- Pallas kernels

def _conv_stats_kernel(*refs, flat_shifts, has_pre, has_aux):
    """Direct (im2col-free) conv as shift-grouped GEMMs + per-tile BN statistics.

    y[:, r] = bias + sum_s  mask_s[r] * (W_s @ x[:, r + delta_s])
    Tiles contain whole images, so every valid shifted read stays inside the
    tile; invalid (border) reads are masked to zero == conv zero-padding.
    """
    it = iter(refs)
    x_ref = next(it)
    w_ref = next(it)
    b_ref = next(it)
    m_ref = next(it)
    if has_pre:
        psc_ref = next(it)
        psh_ref = next(it)
        alpha_ref = next(it)
    if has_aux:
        wd_ref = next(it)
        bd_ref = next(it)
    y_ref = next(it)
    s_ref = next(it)
    q_ref = next(it)
    if has_aux:
        yd_ref = next(it)
        sd_ref = next(it)
        qd_ref = next(it)

    x = x_ref[...].astype(jnp.float32)
    if has_pre:
        # Fused bn1 (folded per-channel scale/shift) + PReLU on the conv input.
        x = x * psc_ref[...] + psh_ref[...]
        alpha = alpha_ref[0]
        x = jnp.where(x >= 0.0, x, alpha * x)

    tr = x.shape[1]
    cout = w_ref.shape[1]
    acc = jnp.zeros((cout, tr), jnp.float32)
    for s, delta in enumerate(flat_shifts):
        xs = x if delta == 0 else pltpu.roll(x, shift=(-delta) % tr, axis=1)
        contrib = jnp.dot(w_ref[s], xs, preferred_element_type=jnp.float32)
        if delta != 0:
            contrib = contrib * m_ref[s]
        acc = acc + contrib
    y = acc + b_ref[...]
    y_ref[...] = y.astype(y_ref.dtype)
    # Per-tile partial BN statistics (reduced in XLA) -> grid axis stays parallel.
    s_ref[0] = jnp.sum(y, axis=1, keepdims=True)
    q_ref[0] = jnp.sum(y * y, axis=1, keepdims=True)

    if has_aux:
        # Fused 1x1 strided downsample conv: it reads the (p=0, q=0) channels of
        # the space-to-depth input, already resident in this tile.
        yd = jnp.dot(wd_ref[...], x, preferred_element_type=jnp.float32) + bd_ref[...]
        yd_ref[...] = yd.astype(yd_ref.dtype)
        sd_ref[0] = jnp.sum(yd, axis=1, keepdims=True)
        qd_ref[0] = jnp.sum(yd * yd, axis=1, keepdims=True)


def _resid_fused_kernel(*refs, use_in, bn_identity, hw):
    """bn2 (folded) + [bnd (folded)] + residual add + per-image InstanceNorm + PReLU."""
    it = iter(refs)
    y2_ref = next(it)
    sc2_ref = next(it)
    sh2_ref = next(it)
    id_ref = next(it)
    if bn_identity:
        scd_ref = next(it)
        shd_ref = next(it)
    if use_in:
        seg_ref = next(it)
        segt_ref = next(it)
    alpha_ref = next(it)
    o_ref = next(it)

    out = y2_ref[...].astype(jnp.float32) * sc2_ref[...] + sh2_ref[...]
    ident = id_ref[...].astype(jnp.float32)
    if bn_identity:
        ident = ident * scd_ref[...] + shd_ref[...]
    out = out + ident

    if use_in:
        # Per-image stats over each HW column group via segment-indicator matmuls
        # (several images per tile -> lane-dense stores, per-step cost amortized).
        inv_hw = 1.0 / hw
        seg = seg_ref[...]
        mean = jnp.dot(out, seg, preferred_element_type=jnp.float32) * inv_hw
        ex2 = jnp.dot(out * out, seg, preferred_element_type=jnp.float32) * inv_hw
        var = jnp.maximum(ex2 - mean * mean, 0.0)          # clamp f32 cancellation
        inv = jax.lax.rsqrt(var + EPS)
        segt = segt_ref[...]
        mean_b = jnp.dot(mean, segt, preferred_element_type=jnp.float32)
        inv_b = jnp.dot(inv, segt, preferred_element_type=jnp.float32)
        out = (out - mean_b) * inv_b

    alpha = alpha_ref[0]
    o_ref[...] = jnp.where(out >= 0.0, out, alpha * out).astype(o_ref.dtype)


# ---------------------------------------------------------------- pallas_call wrappers

def _tapconv(x_flat, w_shift, bias_col, masks, flat_shifts, tr, *,
             pre=None, aux=None, out_dtype=jnp.float32):
    """Conv as shift-grouped GEMMs in (C, rows) layout + partial BN statistics."""
    k_rows, rows = x_flat.shape
    n_shifts, cout, k_w = w_shift.shape
    assert k_w == k_rows and rows % tr == 0
    nt = rows // tr
    depth = 3 if nt >= 3 else 2

    in_specs = [
        _buffered_spec((k_rows, tr), lambda i: (0, i), depth),          # activation stream
        pl.BlockSpec((n_shifts, cout, k_rows), lambda i: (0, 0, 0)),    # per-shift weights
        pl.BlockSpec((cout, 1), lambda i: (0, 0)),                      # bias
        pl.BlockSpec((n_shifts, 1, tr), lambda i: (0, 0, 0)),           # border masks
    ]
    args = [x_flat, w_shift, bias_col, masks]
    has_pre = pre is not None
    if has_pre:
        psc, psh, alpha = pre
        in_specs += [pl.BlockSpec((k_rows, 1), lambda i: (0, 0)),
                     pl.BlockSpec((k_rows, 1), lambda i: (0, 0)),
                     pl.BlockSpec(memory_space=pltpu.MemorySpace.SMEM)]
        args += [psc, psh, alpha]
    has_aux = aux is not None
    if has_aux:
        wd_mat, bd_col = aux
        in_specs += [pl.BlockSpec((cout, k_rows), lambda i: (0, 0)),
                     pl.BlockSpec((cout, 1), lambda i: (0, 0))]
        args += [wd_mat, bd_col]

    out_specs = [pl.BlockSpec((cout, tr), lambda i: (0, i)),
                 pl.BlockSpec((1, cout, 1), lambda i: (i, 0, 0)),
                 pl.BlockSpec((1, cout, 1), lambda i: (i, 0, 0))]
    out_shape = [jax.ShapeDtypeStruct((cout, rows), out_dtype),
                 jax.ShapeDtypeStruct((nt, cout, 1), jnp.float32),
                 jax.ShapeDtypeStruct((nt, cout, 1), jnp.float32)]
    if has_aux:
        out_specs += [pl.BlockSpec((cout, tr), lambda i: (0, i)),
                      pl.BlockSpec((1, cout, 1), lambda i: (i, 0, 0)),
                      pl.BlockSpec((1, cout, 1), lambda i: (i, 0, 0))]
        out_shape += [jax.ShapeDtypeStruct((cout, rows), out_dtype),
                      jax.ShapeDtypeStruct((nt, cout, 1), jnp.float32),
                      jax.ShapeDtypeStruct((nt, cout, 1), jnp.float32)]

    return pl.pallas_call(
        functools.partial(_conv_stats_kernel, flat_shifts=tuple(flat_shifts),
                          has_pre=has_pre, has_aux=has_aux),
        grid=(nt,),
        in_specs=in_specs,
        out_specs=tuple(out_specs),
        out_shape=tuple(out_shape),
        compiler_params=pltpu.CompilerParams(
            dimension_semantics=("parallel",),      # partial stats -> no cross-tile dep
            vmem_limit_bytes=VMEM_LIMIT),
    )(*args)


def _resid_fused(y2, sc2, sh2, ident, bn_id, alpha, use_in, hw, tg):
    cout, rows = y2.shape
    assert rows % tg == 0 and tg % hw == 0
    nt = rows // tg
    g = tg // hw
    depth = 3 if nt >= 3 else 2

    in_specs = [_buffered_spec((cout, tg), lambda i: (0, i), depth),
                pl.BlockSpec((cout, 1), lambda i: (0, 0)),
                pl.BlockSpec((cout, 1), lambda i: (0, 0)),
                _buffered_spec((cout, tg), lambda i: (0, i), depth)]
    args = [y2, sc2, sh2, ident]
    bn_identity = bn_id is not None
    if bn_identity:
        scd, shd = bn_id
        in_specs += [pl.BlockSpec((cout, 1), lambda i: (0, 0)),
                     pl.BlockSpec((cout, 1), lambda i: (0, 0))]
        args += [scd, shd]
    if use_in:
        g_pad = ((g + 7) // 8) * 8       # pad segment count for MXU-friendly dims
        img = jnp.arange(tg, dtype=jnp.int32) // hw
        seg = (img[:, None] == jnp.arange(g_pad, dtype=jnp.int32)[None, :]
               ).astype(jnp.float32)                               # (tg, g_pad)
        in_specs += [pl.BlockSpec((tg, g_pad), lambda i: (0, 0)),
                     pl.BlockSpec((g_pad, tg), lambda i: (0, 0))]
        args += [seg, jnp.transpose(seg)]
    in_specs.append(pl.BlockSpec(memory_space=pltpu.MemorySpace.SMEM))
    args.append(alpha)

    return pl.pallas_call(
        functools.partial(_resid_fused_kernel, use_in=use_in,
                          bn_identity=bn_identity, hw=hw),
        grid=(nt,),
        in_specs=in_specs,
        out_specs=pl.BlockSpec((cout, tg), lambda i: (0, i)),
        out_shape=jax.ShapeDtypeStruct((cout, rows), jnp.float32),
        compiler_params=pltpu.CompilerParams(
            dimension_semantics=("parallel",),
            vmem_limit_bytes=VMEM_LIMIT),
    )(*args)


# ---------------------------------------------------------------- XLA-side helpers

def _fold_bn(part_sum, part_sumsq, gamma, beta, count):
    """Reduce per-tile partial stats and fold BatchNorm into scale/shift (tiny)."""
    s = jnp.sum(part_sum, axis=0)                       # (cout, 1)
    q = jnp.sum(part_sumsq, axis=0)
    mean = s / count
    var = jnp.maximum(q / count - mean * mean, 0.0)     # clamp f32 cancellation
    scale = gamma.reshape(-1, 1) * jax.lax.rsqrt(var + EPS)
    shift = beta.reshape(-1, 1) - mean * scale
    return scale, shift


def _shift_masks(shifts, ho, wo, tr):
    """(n_shifts, 1, tr) f32 border-validity masks, periodic per image."""
    hw = ho * wo
    assert tr % hw == 0
    r = jnp.arange(hw, dtype=jnp.int32)
    h = r // wo
    w = r % wo
    rows = []
    for dy, dx in shifts:
        ok = (h + dy >= 0) & (h + dy < ho) & (w + dx >= 0) & (w + dx < wo)
        rows.append(ok)
    m = jnp.stack(rows).astype(jnp.float32)             # (n_shifts, hw)
    m = jnp.tile(m, (1, tr // hw))
    return m.reshape(len(shifts), 1, tr)


def _stride1_shift_weights(w):
    """kxk 'same' stride-1 conv -> (shift list, (k*k, cout, cin) weight stack)."""
    cout, cin, kh, kw = w.shape
    ph, pw = (kh - 1) // 2, (kw - 1) // 2
    shifts, mats = [], []
    for di in range(kh):
        for dj in range(kw):
            shifts.append((di - ph, dj - pw))
            mats.append(w[:, :, di, dj])
    return shifts, jnp.stack(mats)


def _s2d_shift_weights(w):
    """3x3 stride-2 pad-1 conv == 4-shift conv on the space-to-depth input."""
    cout, cin = w.shape[:2]
    wm = jnp.zeros((4, cout, 4 * cin), jnp.float32)
    for di in range(3):
        p = (di - 1) % 2
        dy = (di - 1 - p) // 2                          # -1 or 0
        for dj in range(3):
            q = (dj - 1) % 2
            dx = (dj - 1 - q) // 2
            s = (dy + 1) * 2 + (dx + 1)
            c0 = (p * 2 + q) * cin
            wm = wm.at[s, :, c0:c0 + cin].add(w[:, :, di, dj])
    return [(-1, -1), (-1, 0), (0, -1), (0, 0)], wm


# ---------------------------------------------------------------- forward pass

def event_encoder_forward(x, params, *, stride, padding, use_instance_norm):
    n, cin, h, w = x.shape
    cout = params['w1'].shape[0]
    k1 = params['w1'].shape[2]
    k2 = params['w2'].shape[2]
    assert 2 * padding == k2 - 1, "conv2 must be a 'same' convolution"

    if stride == 1:
        assert 2 * padding == k1 - 1 and cin == cout, \
            "stride-1 residual path requires a 'same' conv1 and cin == cout"
        ho, wo = h, w
        x_flat = jnp.transpose(x, (1, 0, 2, 3)).reshape(cin, n * h * w)
        src1 = x_flat
        shifts1, w1s = _stride1_shift_weights(params['w1'])
        aux1 = None
        ident = x_flat
    else:
        assert stride == 2 and k1 == 3 and padding == 1 and h % 2 == 0 and w % 2 == 0, \
            "strided path supports kernel=3, stride=2, padding=1, even H/W"
        ho, wo = h // 2, w // 2
        # Space-to-depth relayout (single pass over the input, stored in bf16):
        # channel layout (p*2+q)*cin + ci, rows n-major / spatial-minor.
        src1 = (x.reshape(n, cin, ho, 2, wo, 2)
                  .transpose(3, 5, 1, 0, 2, 4)
                  .reshape(4 * cin, n * ho * wo)
                  .astype(STREAM_DTYPE))
        shifts1, w1s = _s2d_shift_weights(params['w1'])
        wdm = jnp.zeros((cout, 4 * cin), jnp.float32).at[:, :cin].set(
            params['wd'].reshape(cout, cin))
        aux1 = (wdm, params['bd'].reshape(cout, 1))
        ident = None

    hw = ho * wo
    rows = n * hw
    tr = _pick_row_tile(n, hw, CONV_TILE_CAP)

    # ---- conv1 (+ fused 1x1 downsample conv) + per-tile BN statistics ----
    flat1 = [dy * wo + dx for dy, dx in shifts1]
    masks1 = _shift_masks(shifts1, ho, wo, tr)
    outs1 = _tapconv(src1, w1s, params['b1'].reshape(cout, 1), masks1, flat1, tr,
                     aux=aux1, out_dtype=STREAM_DTYPE)
    if aux1 is not None:
        y1, s1p, q1p, yd, sdp, qdp = outs1
    else:
        y1, s1p, q1p = outs1

    # ---- bn1 folded + fused with PReLU into the conv2 kernel ----
    sc1, sh1 = _fold_bn(s1p, q1p, params['g1'], params['be1'], rows)
    shifts2, w2s = _stride1_shift_weights(params['w2'])
    flat2 = [dy * wo + dx for dy, dx in shifts2]
    masks2 = _shift_masks(shifts2, ho, wo, tr)
    y2, s2p, q2p = _tapconv(y1, w2s, params['b2'].reshape(cout, 1), masks2, flat2, tr,
                            pre=(sc1, sh1, params['alpha']),
                            out_dtype=STREAM_DTYPE)

    # ---- fold bn2 / bnd ----
    sc2, sh2 = _fold_bn(s2p, q2p, params['g2'], params['be2'], rows)
    if stride != 1:
        scd, shd = _fold_bn(sdp, qdp, params['gd'], params['bed'], rows)
        ident = yd
        bn_id = (scd, shd)
    else:
        bn_id = None

    # ---- bn2 + (bnd) + residual add + InstanceNorm + PReLU, fused ----
    # TODO(synk): for images whose HW exceeds one tile, InstanceNorm would need a
    # two-pass cross-tile reduction.
    tg = _pick_row_tile(n, hw, RESID_TILE_CAP)
    out_flat = _resid_fused(y2, sc2, sh2, ident, bn_id, params['alpha'],
                            use_instance_norm, hw, tg)

    # Single layout conversion back to NCHW, at the very end.
    return jnp.transpose(out_flat.reshape(cout, n, ho, wo), (1, 0, 2, 3))


# ---------------------------------------------------------------- main

if __name__ == "__main__":
    # module config: channels_in=4, channels_out=8, kernel_size=3, stride=2,
    # padding=1, use_instance_norm=True
    N, Cin, H, W = 2, 4, 16, 16
    Cout, k, stride, padding = 8, 3, 2, 1
    use_instance_norm = True

    key = jax.random.PRNGKey(0)
    keys = jax.random.split(key, 13)
    f32 = jnp.float32
    params = {
        'w1':  0.1 * jax.random.normal(keys[0],  (Cout, Cin, k, k), f32),
        'b1':  0.1 * jax.random.normal(keys[1],  (Cout,), f32),
        'g1':  1.0 + 0.1 * jax.random.normal(keys[2], (Cout,), f32),
        'be1': 0.1 * jax.random.normal(keys[3],  (Cout,), f32),
        'w2':  0.1 * jax.random.normal(keys[4],  (Cout, Cout, k, k), f32),
        'b2':  0.1 * jax.random.normal(keys[5],  (Cout,), f32),
        'g2':  1.0 + 0.1 * jax.random.normal(keys[6], (Cout,), f32),
        'be2': 0.1 * jax.random.normal(keys[7],  (Cout,), f32),
        'wd':  0.1 * jax.random.normal(keys[8],  (Cout, Cin, 1, 1), f32),
        'bd':  0.1 * jax.random.normal(keys[9],  (Cout,), f32),
        'gd':  1.0 + 0.1 * jax.random.normal(keys[10], (Cout,), f32),
        'bed': 0.1 * jax.random.normal(keys[11], (Cout,), f32),
        'alpha': jnp.full((1,), 0.25, f32),   # nn.PReLU() default (shared alpha)
    }
    x = jax.random.normal(keys[12], (N, Cin, H, W), f32)

    fwd = jax.jit(functools.partial(event_encoder_forward, stride=stride,
                                    padding=padding,
                                    use_instance_norm=use_instance_norm))
    out = jax.block_until_ready(fwd(x, params))
    assert out.shape == (N, Cout, H // stride, W // stride), out.shape
    assert bool(jnp.all(jnp.isfinite(out)))
    print("KERNEL_OK")
</pallas_src>

<mosaic_0001>
module attributes {stable_mosaic.version = 11 : i64} {
  func.func @_conv_stats_kernel(%arg0: i32, %arg1: memref<16x128xbf16, #tpu.memory_space<vmem>>, %arg2: memref<4x8x16xf32, #tpu.memory_space<vmem>>, %arg3: memref<8x1xf32, #tpu.memory_space<vmem>>, %arg4: memref<4x1x128xf32, #tpu.memory_space<vmem>>, %arg5: memref<8x16xf32, #tpu.memory_space<vmem>>, %arg6: memref<8x1xf32, #tpu.memory_space<vmem>>, %arg7: memref<8x128xbf16, #tpu.memory_space<vmem>>, %arg8: memref<1x8x1xf32, #tpu.memory_space<vmem>>, %arg9: memref<1x8x1xf32, #tpu.memory_space<vmem>>, %arg10: memref<8x128xbf16, #tpu.memory_space<vmem>>, %arg11: memref<1x8x1xf32, #tpu.memory_space<vmem>>, %arg12: memref<1x8x1xf32, #tpu.memory_space<vmem>>) attributes {dimension_semantics = [#tpu.dimension_semantics<parallel>], iteration_bounds = array<i64: 1>, scalar_prefetch = 0 : i64, scratch_operands = 0 : i64, tpu.core_type = #tpu.core_type<tc>, window_params = [{transform_indices = @transform_0, window_bounds = array<i64: 16, 128>}, {pipeline_mode = #tpu.pipeline_mode<synchronous>, transform_indices = @transform_1, window_bounds = array<i64: 4, 8, 16>}, {pipeline_mode = #tpu.pipeline_mode<synchronous>, transform_indices = @transform_2, window_bounds = array<i64: 8, 1>}, {pipeline_mode = #tpu.pipeline_mode<synchronous>, transform_indices = @transform_3, window_bounds = array<i64: 4, 1, 128>}, {pipeline_mode = #tpu.pipeline_mode<synchronous>, transform_indices = @transform_4, window_bounds = array<i64: 8, 16>}, {pipeline_mode = #tpu.pipeline_mode<synchronous>, transform_indices = @transform_5, window_bounds = array<i64: 8, 1>}, {transform_indices = @transform_6, window_bounds = array<i64: 8, 128>}, {transform_indices = @transform_7, window_bounds = array<i64: 1, 8, 1>}, {transform_indices = @transform_8, window_bounds = array<i64: 1, 8, 1>}, {transform_indices = @transform_9, window_bounds = array<i64: 8, 128>}, {transform_indices = @transform_10, window_bounds = array<i64: 1, 8, 1>}, {transform_indices = @transform_11, window_bounds = array<i64: 1, 8, 1>}]} {
    %c0 = arith.constant 0 : index
    %c0_0 = arith.constant 0 : index
    %0 = vector.load %arg1[%c0, %c0_0] : memref<16x128xbf16, #tpu.memory_space<vmem>>, vector<16x128xbf16>
    %1 = arith.extf %0 : vector<16x128xbf16> to vector<16x128xf32>
    %cst = arith.constant 0.000000e+00 : f32
    %2 = vector.broadcast %cst : f32 to vector<8x128xf32>
    %c9_i32 = arith.constant 9 : i32
    %3 = tpu.dynamic_rotate %1 by %c9_i32 dim 1 : vector<16x128xf32>, i32 -> vector<16x128xf32>
    %c0_1 = arith.constant 0 : index
    %c0_2 = arith.constant 0 : index
    %c0_3 = arith.constant 0 : index
    %4 = vector.load %arg2[%c0_1, %c0_2, %c0_3] : memref<4x8x16xf32, #tpu.memory_space<vmem>>, vector<1x8x16xf32>
    %5 = vector.shape_cast %4 : vector<1x8x16xf32> to vector<8x16xf32>
    %cst_4 = arith.constant dense<0.000000e+00> : vector<8x128xf32>
    %6 = tpu.matmul %5, %3, %cst_4 {dimension_numbers = #tpu.dot_dimension_numbers<[1], [0], [0], [1], [0, 0, 1, 1], [], []>} : vector<8x16xf32>, vector<16x128xf32>, vector<8x128xf32> -> vector<8x128xf32>
    %c0_5 = arith.constant 0 : index
    %c0_6 = arith.constant 0 : index
    %c0_7 = arith.constant 0 : index
    %7 = vector.load %arg4[%c0_5, %c0_6, %c0_7] : memref<4x1x128xf32, #tpu.memory_space<vmem>>, vector<1x1x128xf32>
    %8 = vector.shape_cast %7 : vector<1x1x128xf32> to vector<1x128xf32>
    %9 = vector.broadcast %8 : vector<1x128xf32> to vector<8x128xf32>
    %10 = arith.mulf %6, %9 : vector<8x128xf32>
    %11 = arith.addf %2, %10 : vector<8x128xf32>
    %c8_i32 = arith.constant 8 : i32
    %12 = tpu.dynamic_rotate %1 by %c8_i32 dim 1 : vector<16x128xf32>, i32 -> vector<16x128xf32>
    %c1 = arith.constant 1 : index
    %c0_8 = arith.constant 0 : index
    %c0_9 = arith.constant 0 : index
    %13 = vector.load %arg2[%c1, %c0_8, %c0_9] : memref<4x8x16xf32, #tpu.memory_space<vmem>>, vector<1x8x16xf32>
    %14 = vector.shape_cast %13 : vector<1x8x16xf32> to vector<8x16xf32>
    %cst_10 = arith.constant dense<0.000000e+00> : vector<8x128xf32>
    %15 = tpu.matmul %14, %12, %cst_10 {dimension_numbers = #tpu.dot_dimension_numbers<[1], [0], [0], [1], [0, 0, 1, 1], [], []>} : vector<8x16xf32>, vector<16x128xf32>, vector<8x128xf32> -> vector<8x128xf32>
    %c1_11 = arith.constant 1 : index
    %c0_12 = arith.constant 0 : index
    %c0_13 = arith.constant 0 : index
    %16 = vector.load %arg4[%c1_11, %c0_12, %c0_13] : memref<4x1x128xf32, #tpu.memory_space<vmem>>, vector<1x1x128xf32>
    %17 = vector.shape_cast %16 : vector<1x1x128xf32> to vector<1x128xf32>
    %18 = vector.broadcast %17 : vector<1x128xf32> to vector<8x128xf32>
    %19 = arith.mulf %15, %18 : vector<8x128xf32>
    %20 = arith.addf %11, %19 : vector<8x128xf32>
    %c1_i32 = arith.constant 1 : i32
    %21 = tpu.dynamic_rotate %1 by %c1_i32 dim 1 : vector<16x128xf32>, i32 -> vector<16x128xf32>
    %c2 = arith.constant 2 : index
    %c0_14 = arith.constant 0 : index
    %c0_15 = arith.constant 0 : index
    %22 = vector.load %arg2[%c2, %c0_14, %c0_15] : memref<4x8x16xf32, #tpu.memory_space<vmem>>, vector<1x8x16xf32>
    %23 = vector.shape_cast %22 : vector<1x8x16xf32> to vector<8x16xf32>
    %cst_16 = arith.constant dense<0.000000e+00> : vector<8x128xf32>
    %24 = tpu.matmul %23, %21, %cst_16 {dimension_numbers = #tpu.dot_dimension_numbers<[1], [0], [0], [1], [0, 0, 1, 1], [], []>} : vector<8x16xf32>, vector<16x128xf32>, vector<8x128xf32> -> vector<8x128xf32>
    %c2_17 = arith.constant 2 : index
    %c0_18 = arith.constant 0 : index
    %c0_19 = arith.constant 0 : index
    %25 = vector.load %arg4[%c2_17, %c0_18, %c0_19] : memref<4x1x128xf32, #tpu.memory_space<vmem>>, vector<1x1x128xf32>
    %26 = vector.shape_cast %25 : vector<1x1x128xf32> to vector<1x128xf32>
    %27 = vector.broadcast %26 : vector<1x128xf32> to vector<8x128xf32>
    %28 = arith.mulf %24, %27 : vector<8x128xf32>
    %29 = arith.addf %20, %28 : vector<8x128xf32>
    %c3 = arith.constant 3 : index
    %c0_20 = arith.constant 0 : index
    %c0_21 = arith.constant 0 : index
    %30 = vector.load %arg2[%c3, %c0_20, %c0_21] : memref<4x8x16xf32, #tpu.memory_space<vmem>>, vector<1x8x16xf32>
    %31 = vector.shape_cast %30 : vector<1x8x16xf32> to vector<8x16xf32>
    %cst_22 = arith.constant dense<0.000000e+00> : vector<8x128xf32>
    %32 = tpu.matmul %31, %1, %cst_22 {dimension_numbers = #tpu.dot_dimension_numbers<[1], [0], [0], [1], [0, 0, 1, 1], [], []>} : vector<8x16xf32>, vector<16x128xf32>, vector<8x128xf32> -> vector<8x128xf32>
    %33 = arith.addf %29, %32 : vector<8x128xf32>
    %c0_23 = arith.constant 0 : index
    %c0_24 = arith.constant 0 : index
    %34 = vector.load %arg3[%c0_23, %c0_24] : memref<8x1xf32, #tpu.memory_space<vmem>>, vector<8x1xf32>
    %35 = vector.broadcast %34 : vector<8x1xf32> to vector<8x128xf32>
    %36 = arith.addf %33, %35 : vector<8x128xf32>
    %37 = arith.truncf %36 : vector<8x128xf32> to vector<8x128xbf16>
    %c0_25 = arith.constant 0 : index
    %c0_26 = arith.constant 0 : index
    %38 = vector.load %arg7[%c0_25, %c0_26] : memref<8x128xbf16, #tpu.memory_space<vmem>>, vector<8x128xbf16>
    tpu.vector_store %arg7[%c0_25, %c0_26], %37 {strides = array<i32>} : memref<8x128xbf16, #tpu.memory_space<vmem>>, vector<8x128xbf16>,
    %cst_27 = arith.constant dense<0.000000e+00> : vector<8xf32>
    %39 = vector.multi_reduction <add>, %36, %cst_27 [1] : vector<8x128xf32> to vector<8xf32>
    %40 = vector.shape_cast %39 : vector<8xf32> to vector<8x1xf32>
    %c0_28 = arith.constant 0 : index
    %c0_29 = arith.constant 0 : index
    %c0_30 = arith.constant 0 : index
    %41 = vector.load %arg8[%c0_28, %c0_29, %c0_30] : memref<1x8x1xf32, #tpu.memory_space<vmem>>, vector<1x8x1xf32>
    %42 = vector.shape_cast %41 : vector<1x8x1xf32> to vector<8x1xf32>
    %43 = vector.shape_cast %40 : vector<8x1xf32> to vector<1x8x1xf32>
    tpu.vector_store %arg8[%c0_28, %c0_29, %c0_30], %43 {strides = array<i32>} : memref<1x8x1xf32, #tpu.memory_space<vmem>>, vector<1x8x1xf32>,
    %44 = arith.mulf %36, %36 : vector<8x128xf32>
    %cst_31 = arith.constant dense<0.000000e+00> : vector<8xf32>
    %45 = vector.multi_reduction <add>, %44, %cst_31 [1] : vector<8x128xf32> to vector<8xf32>
    %46 = vector.shape_cast %45 : vector<8xf32> to vector<8x1xf32>
    %c0_32 = arith.constant 0 : index
    %c0_33 = arith.constant 0 : index
    %c0_34 = arith.constant 0 : index
    %47 = vector.load %arg9[%c0_32, %c0_33, %c0_34] : memref<1x8x1xf32, #tpu.memory_space<vmem>>, vector<1x8x1xf32>
    %48 = vector.shape_cast %47 : vector<1x8x1xf32> to vector<8x1xf32>
    %49 = vector.shape_cast %46 : vector<8x1xf32> to vector<1x8x1xf32>
    tpu.vector_store %arg9[%c0_32, %c0_33, %c0_34], %49 {strides = array<i32>} : memref<1x8x1xf32, #tpu.memory_space<vmem>>, vector<1x8x1xf32>,
    %c0_35 = arith.constant 0 : index
    %c0_36 = arith.constant 0 : index
    %50 = vector.load %arg5[%c0_35, %c0_36] : memref<8x16xf32, #tpu.memory_space<vmem>>, vector<8x16xf32>
    %cst_37 = arith.constant dense<0.000000e+00> : vector<8x128xf32>
    %51 = tpu.matmul %50, %1, %cst_37 {dimension_numbers = #tpu.dot_dimension_numbers<[1], [0], [0], [1], [0, 0, 1, 1], [], []>} : vector<8x16xf32>, vector<16x128xf32>, vector<8x128xf32> -> vector<8x128xf32>
    %c0_38 = arith.constant 0 : index
    %c0_39 = arith.constant 0 : index
    %52 = vector.load %arg6[%c0_38, %c0_39] : memref<8x1xf32, #tpu.memory_space<vmem>>, vector<8x1xf32>
    %53 = vector.broadcast %52 : vector<8x1xf32> to vector<8x128xf32>
    %54 = arith.addf %51, %53 : vector<8x128xf32>
    %55 = arith.truncf %54 : vector<8x128xf32> to vector<8x128xbf16>
    %c0_40 = arith.constant 0 : index
    %c0_41 = arith.constant 0 : index
    %56 = vector.load %arg10[%c0_40, %c0_41] : memref<8x128xbf16, #tpu.memory_space<vmem>>, vector<8x128xbf16>
    tpu.vector_store %arg10[%c0_40, %c0_41], %55 {strides = array<i32>} : memref<8x128xbf16, #tpu.memory_space<vmem>>, vector<8x128xbf16>,
    %cst_42 = arith.constant dense<0.000000e+00> : vector<8xf32>
    %57 = vector.multi_reduction <add>, %54, %cst_42 [1] : vector<8x128xf32> to vector<8xf32>
    %58 = vector.shape_cast %57 : vector<8xf32> to vector<8x1xf32>
    %c0_43 = arith.constant 0 : index
    %c0_44 = arith.constant 0 : index
    %c0_45 = arith.constant 0 : index
    %59 = vector.load %arg11[%c0_43, %c0_44, %c0_45] : memref<1x8x1xf32, #tpu.memory_space<vmem>>, vector<1x8x1xf32>
    %60 = vector.shape_cast %59 : vector<1x8x1xf32> to vector<8x1xf32>
    %61 = vector.shape_cast %58 : vector<8x1xf32> to vector<1x8x1xf32>
    tpu.vector_store %arg11[%c0_43, %c0_44, %c0_45], %61 {strides = array<i32>} : memref<1x8x1xf32, #tpu.memory_space<vmem>>, vector<1x8x1xf32>,
    %62 = arith.mulf %54, %54 : vector<8x128xf32>
    %cst_46 = arith.constant dense<0.000000e+00> : vector<8xf32>
    %63 = vector.multi_reduction <add>, %62, %cst_46 [1] : vector<8x128xf32> to vector<8xf32>
    %64 = vector.shape_cast %63 : vector<8xf32> to vector<8x1xf32>
    %c0_47 = arith.constant 0 : index
    %c0_48 = arith.constant 0 : index
    %c0_49 = arith.constant 0 : index
    %65 = vector.load %arg12[%c0_47, %c0_48, %c0_49] : memref<1x8x1xf32, #tpu.memory_space<vmem>>, vector<1x8x1xf32>
    %66 = vector.shape_cast %65 : vector<1x8x1xf32> to vector<8x1xf32>
    %67 = vector.shape_cast %64 : vector<8x1xf32> to vector<1x8x1xf32>
    tpu.vector_store %arg12[%c0_47, %c0_48, %c0_49], %67 {strides = array<i32>} : memref<1x8x1xf32, #tpu.memory_space<vmem>>, vector<1x8x1xf32>,
    return
  }
  func.func @transform_0(%arg0: i32) -> (i32, i32) {
    %c0_i32 = arith.constant 0 : i32
    %c0_i32_0 = arith.constant 0 : i32
    return %c0_i32, %arg0 : i32, i32
  }
  func.func @transform_1(%arg0: i32) -> (i32, i32, i32) {
    %c0_i32 = arith.constant 0 : i32
    %c0_i32_0 = arith.constant 0 : i32
    %c0_i32_1 = arith.constant 0 : i32
    %c0_i32_2 = arith.constant 0 : i32
    return %c0_i32, %c0_i32_0, %c0_i32_1 : i32, i32, i32
  }
  func.func @transform_2(%arg0: i32) -> (i32, i32) {
    %c0_i32 = arith.constant 0 : i32
    %c0_i32_0 = arith.constant 0 : i32
    %c0_i32_1 = arith.constant 0 : i32
    return %c0_i32, %c0_i32_0 : i32, i32
  }
  func.func @transform_3(%arg0: i32) -> (i32, i32, i32) {
    %c0_i32 = arith.constant 0 : i32
    %c0_i32_0 = arith.constant 0 : i32
    %c0_i32_1 = arith.constant 0 : i32
    %c0_i32_2 = arith.constant 0 : i32
    return %c0_i32, %c0_i32_0, %c0_i32_1 : i32, i32, i32
  }
  func.func @transform_4(%arg0: i32) -> (i32, i32) {
    %c0_i32 = arith.constant 0 : i32
    %c0_i32_0 = arith.constant 0 : i32
    %c0_i32_1 = arith.constant 0 : i32
    return %c0_i32, %c0_i32_0 : i32, i32
  }
  func.func @transform_5(%arg0: i32) -> (i32, i32) {
    %c0_i32 = arith.constant 0 : i32
    %c0_i32_0 = arith.constant 0 : i32
    %c0_i32_1 = arith.constant 0 : i32
    return %c0_i32, %c0_i32_0 : i32, i32
  }
  func.func @transform_6(%arg0: i32) -> (i32, i32) {
    %c0_i32 = arith.constant 0 : i32
    %c0_i32_0 = arith.constant 0 : i32
    return %c0_i32, %arg0 : i32, i32
  }
  func.func @transform_7(%arg0: i32) -> (i32, i32, i32) {
    %c0_i32 = arith.constant 0 : i32
    %c0_i32_0 = arith.constant 0 : i32
    %c0_i32_1 = arith.constant 0 : i32
    return %arg0, %c0_i32, %c0_i32_0 : i32, i32, i32
  }
  func.func @transform_8(%arg0: i32) -> (i32, i32, i32) {
    %c0_i32 = arith.constant 0 : i32
    %c0_i32_0 = arith.constant 0 : i32
    %c0_i32_1 = arith.constant 0 : i32
    return %arg0, %c0_i32, %c0_i32_0 : i32, i32, i32
  }
  func.func @transform_9(%arg0: i32) -> (i32, i32) {
    %c0_i32 = arith.constant 0 : i32
    %c0_i32_0 = arith.constant 0 : i32
    return %c0_i32, %arg0 : i32, i32
  }
  func.func @transform_10(%arg0: i32) -> (i32, i32, i32) {
    %c0_i32 = arith.constant 0 : i32
    %c0_i32_0 = arith.constant 0 : i32
    %c0_i32_1 = arith.constant 0 : i32
    return %arg0, %c0_i32, %c0_i32_0 : i32, i32, i32
  }
  func.func @transform_11(%arg0: i32) -> (i32, i32, i32) {
    %c0_i32 = arith.constant 0 : i32
    %c0_i32_0 = arith.constant 0 : i32
    %c0_i32_1 = arith.constant 0 : i32
    return %arg0, %c0_i32, %c0_i32_0 : i32, i32, i32
  }
}

module attributes {stable_mosaic.version = 11 : i64} {
  func.func @_resid_fused_kernel(%arg0: i32, %arg1: memref<8x128xbf16, #tpu.memory_space<vmem>>, %arg2: memref<8x1xf32, #tpu.memory_space<vmem>>, %arg3: memref<8x1xf32, #tpu.memory_space<vmem>>, %arg4: memref<8x128xbf16, #tpu.memory_space<vmem>>, %arg5: memref<8x1xf32, #tpu.memory_space<vmem>>, %arg6: memref<8x1xf32, #tpu.memory_space<vmem>>, %arg7: memref<128x8xf32, #tpu.memory_space<vmem>>, %arg8: memref<8x128xf32, #tpu.memory_space<vmem>>, %arg9: memref<1xf32, #tpu.memory_space<smem>>, %arg10: memref<8x128xf32, #tpu.memory_space<vmem>>) attributes {dimension_semantics = [#tpu.dimension_semantics<parallel>], iteration_bounds = array<i64: 1>, scalar_prefetch = 0 : i64, scratch_operands = 0 : i64, tpu.core_type = #tpu.core_type<tc>, window_params = [{transform_indices = @transform_0, window_bounds = array<i64: 8, 128>}, {pipeline_mode = #tpu.pipeline_mode<synchronous>, transform_indices = @transform_1, window_bounds = array<i64: 8, 1>}, {pipeline_mode = #tpu.pipeline_mode<synchronous>, transform_indices = @transform_2, window_bounds = array<i64: 8, 1>}, {transform_indices = @transform_3, window_bounds = array<i64: 8, 128>}, {pipeline_mode = #tpu.pipeline_mode<synchronous>, transform_indices = @transform_4, window_bounds = array<i64: 8, 1>}, {pipeline_mode = #tpu.pipeline_mode<synchronous>, transform_indices = @transform_5, window_bounds = array<i64: 8, 1>}, {pipeline_mode = #tpu.pipeline_mode<synchronous>, transform_indices = @transform_6, window_bounds = array<i64: 128, 8>}, {pipeline_mode = #tpu.pipeline_mode<synchronous>, transform_indices = @transform_7, window_bounds = array<i64: 8, 128>}, {transform_indices = @transform_8, window_bounds = array<i64: 1>}, {transform_indices = @transform_9, window_bounds = array<i64: 8, 128>}]} {
    %c0 = arith.constant 0 : index
    %c0_0 = arith.constant 0 : index
    %0 = vector.load %arg1[%c0, %c0_0] : memref<8x128xbf16, #tpu.memory_space<vmem>>, vector<8x128xbf16>
    %1 = arith.extf %0 : vector<8x128xbf16> to vector<8x128xf32>
    %c0_1 = arith.constant 0 : index
    %c0_2 = arith.constant 0 : index
    %2 = vector.load %arg2[%c0_1, %c0_2] : memref<8x1xf32, #tpu.memory_space<vmem>>, vector<8x1xf32>
    %3 = vector.broadcast %2 : vector<8x1xf32> to vector<8x128xf32>
    %4 = arith.mulf %1, %3 : vector<8x128xf32>
    %c0_3 = arith.constant 0 : index
    %c0_4 = arith.constant 0 : index
    %5 = vector.load %arg3[%c0_3, %c0_4] : memref<8x1xf32, #tpu.memory_space<vmem>>, vector<8x1xf32>
    %6 = vector.broadcast %5 : vector<8x1xf32> to vector<8x128xf32>
    %7 = arith.addf %4, %6 : vector<8x128xf32>
    %c0_5 = arith.constant 0 : index
    %c0_6 = arith.constant 0 : index
    %8 = vector.load %arg4[%c0_5, %c0_6] : memref<8x128xbf16, #tpu.memory_space<vmem>>, vector<8x128xbf16>
    %9 = arith.extf %8 : vector<8x128xbf16> to vector<8x128xf32>
    %c0_7 = arith.constant 0 : index
    %c0_8 = arith.constant 0 : index
    %10 = vector.load %arg5[%c0_7, %c0_8] : memref<8x1xf32, #tpu.memory_space<vmem>>, vector<8x1xf32>
    %11 = vector.broadcast %10 : vector<8x1xf32> to vector<8x128xf32>
    %12 = arith.mulf %9, %11 : vector<8x128xf32>
    %c0_9 = arith.constant 0 : index
    %c0_10 = arith.constant 0 : index
    %13 = vector.load %arg6[%c0_9, %c0_10] : memref<8x1xf32, #tpu.memory_space<vmem>>, vector<8x1xf32>
    %14 = vector.broadcast %13 : vector<8x1xf32> to vector<8x128xf32>
    %15 = arith.addf %12, %14 : vector<8x128xf32>
    %16 = arith.addf %7, %15 : vector<8x128xf32>
    %c0_11 = arith.constant 0 : index
    %c0_12 = arith.constant 0 : index
    %17 = vector.load %arg7[%c0_11, %c0_12] : memref<128x8xf32, #tpu.memory_space<vmem>>, vector<128x8xf32>
    %cst = arith.constant dense<0.000000e+00> : vector<8x8xf32>
    %18 = tpu.matmul %16, %17, %cst {dimension_numbers = #tpu.dot_dimension_numbers<[1], [0], [0], [1], [0, 0, 1, 1], [], []>} : vector<8x128xf32>, vector<128x8xf32>, vector<8x8xf32> -> vector<8x8xf32>
    %cst_13 = arith.constant 1.562500e-02 : f32
    %19 = vector.broadcast %cst_13 : f32 to vector<8x8xf32>
    %20 = arith.mulf %18, %19 : vector<8x8xf32>
    %21 = arith.mulf %16, %16 : vector<8x128xf32>
    %cst_14 = arith.constant dense<0.000000e+00> : vector<8x8xf32>
    %22 = tpu.matmul %21, %17, %cst_14 {dimension_numbers = #tpu.dot_dimension_numbers<[1], [0], [0], [1], [0, 0, 1, 1], [], []>} : vector<8x128xf32>, vector<128x8xf32>, vector<8x8xf32> -> vector<8x8xf32>
    %cst_15 = arith.constant 1.562500e-02 : f32
    %23 = vector.broadcast %cst_15 : f32 to vector<8x8xf32>
    %24 = arith.mulf %22, %23 : vector<8x8xf32>
    %25 = arith.mulf %20, %20 : vector<8x8xf32>
    %26 = arith.subf %24, %25 : vector<8x8xf32>
    %cst_16 = arith.constant 0.000000e+00 : f32
    %27 = vector.broadcast %cst_16 : f32 to vector<8x8xf32>
    %28 = arith.maximumf %26, %27 : vector<8x8xf32>
    %cst_17 = arith.constant 9.99999974E-6 : f32
    %29 = vector.broadcast %cst_17 : f32 to vector<8x8xf32>
    %30 = arith.addf %28, %29 : vector<8x8xf32>
    %31 = math.rsqrt %30 : vector<8x8xf32>
    %c0_18 = arith.constant 0 : index
    %c0_19 = arith.constant 0 : index
    %32 = vector.load %arg8[%c0_18, %c0_19] : memref<8x128xf32, #tpu.memory_space<vmem>>, vector<8x128xf32>
    %cst_20 = arith.constant dense<0.000000e+00> : vector<8x128xf32>
    %33 = tpu.matmul %20, %32, %cst_20 {dimension_numbers = #tpu.dot_dimension_numbers<[1], [0], [0], [1], [0, 0, 1, 1], [], []>} : vector<8x8xf32>, vector<8x128xf32>, vector<8x128xf32> -> vector<8x128xf32>
    %cst_21 = arith.constant dense<0.000000e+00> : vector<8x128xf32>
    %34 = tpu.matmul %31, %32, %cst_21 {dimension_numbers = #tpu.dot_dimension_numbers<[1], [0], [0], [1], [0, 0, 1, 1], [], []>} : vector<8x8xf32>, vector<8x128xf32>, vector<8x128xf32> -> vector<8x128xf32>
    %35 = arith.subf %16, %33 : vector<8x128xf32>
    %36 = arith.mulf %35, %34 : vector<8x128xf32>
    %c0_22 = arith.constant 0 : index
    %37 = memref.load %arg9[%c0_22] : memref<1xf32, #tpu.memory_space<smem>>
    %cst_23 = arith.constant 0.000000e+00 : f32
    %38 = vector.broadcast %cst_23 : f32 to vector<8x128xf32>
    %39 = arith.cmpf oge, %36, %38 : vector<8x128xf32>
    %40 = vector.broadcast %37 : f32 to vector<8x128xf32>
    %41 = arith.mulf %40, %36 : vector<8x128xf32>
    %42 = arith.select %39, %36, %41 : vector<8x128xi1>, vector<8x128xf32>
    %c0_24 = arith.constant 0 : index
    %c0_25 = arith.constant 0 : index
    %43 = vector.load %arg10[%c0_24, %c0_25] : memref<8x128xf32, #tpu.memory_space<vmem>>, vector<8x128xf32>
    tpu.vector_store %arg10[%c0_24, %c0_25], %42 {strides = array<i32>} : memref<8x128xf32, #tpu.memory_space<vmem>>, vector<8x128xf32>,
    return
  }
  func.func @transform_0(%arg0: i32) -> (i32, i32) {
    %c0_i32 = arith.constant 0 : i32
    %c0_i32_0 = arith.constant 0 : i32
    return %c0_i32, %arg0 : i32, i32
  }
  func.func @transform_1(%arg0: i32) -> (i32, i32) {
    %c0_i32 = arith.constant 0 : i32
    %c0_i32_0 = arith.constant 0 : i32
    %c0_i32_1 = arith.constant 0 : i32
    return %c0_i32, %c0_i32_0 : i32, i32
  }
  func.func @transform_2(%arg0: i32) -> (i32, i32) {
    %c0_i32 = arith.constant 0 : i32
    %c0_i32_0 = arith.constant 0 : i32
    %c0_i32_1 = arith.constant 0 : i32
    return %c0_i32, %c0_i32_0 : i32, i32
  }
  func.func @transform_3(%arg0: i32) -> (i32, i32) {
    %c0_i32 = arith.constant 0 : i32
    %c0_i32_0 = arith.constant 0 : i32
    return %c0_i32, %arg0 : i32, i32
  }
  func.func @transform_4(%arg0: i32) -> (i32, i32) {
    %c0_i32 = arith.constant 0 : i32
    %c0_i32_0 = arith.constant 0 : i32
    %c0_i32_1 = arith.constant 0 : i32
    return %c0_i32, %c0_i32_0 : i32, i32
  }
  func.func @transform_5(%arg0: i32) -> (i32, i32) {
    %c0_i32 = arith.constant 0 : i32
    %c0_i32_0 = arith.constant 0 : i32
    %c0_i32_1 = arith.constant 0 : i32
    return %c0_i32, %c0_i32_0 : i32, i32
  }
  func.func @transform_6(%arg0: i32) -> (i32, i32) {
    %c0_i32 = arith.constant 0 : i32
    %c0_i32_0 = arith.constant 0 : i32
    %c0_i32_1 = arith.constant 0 : i32
    return %c0_i32, %c0_i32_0 : i32, i32
  }
  func.func @transform_7(%arg0: i32) -> (i32, i32) {
    %c0_i32 = arith.constant 0 : i32
    %c0_i32_0 = arith.constant 0 : i32
    %c0_i32_1 = arith.constant 0 : i32
    return %c0_i32, %c0_i32_0 : i32, i32
  }
  func.func @transform_8(%arg0: i32) -> i32 {
    %c0_i32 = arith.constant 0 : i32
    %c0_i32_0 = arith.constant 0 : i32
    return %c0_i32 : i32
  }
  func.func @transform_9(%arg0: i32) -> (i32, i32) {
    %c0_i32 = arith.constant 0 : i32
    %c0_i32_0 = arith.constant 0 : i32
    return %c0_i32, %arg0 : i32, i32
  }
}

module attributes {stable_mosaic.version = 11 : i64} {
  func.func @_conv_stats_kernel(%arg0: i32, %arg1: memref<8x128xbf16, #tpu.memory_space<vmem>>, %arg2: memref<9x8x8xf32, #tpu.memory_space<vmem>>, %arg3: memref<8x1xf32, #tpu.memory_space<vmem>>, %arg4: memref<9x1x128xf32, #tpu.memory_space<vmem>>, %arg5: memref<8x1xf32, #tpu.memory_space<vmem>>, %arg6: memref<8x1xf32, #tpu.memory_space<vmem>>, %arg7: memref<1xf32, #tpu.memory_space<smem>>, %arg8: memref<8x128xbf16, #tpu.memory_space<vmem>>, %arg9: memref<1x8x1xf32, #tpu.memory_space<vmem>>, %arg10: memref<1x8x1xf32, #tpu.memory_space<vmem>>) attributes {dimension_semantics = [#tpu.dimension_semantics<parallel>], iteration_bounds = array<i64: 1>, scalar_prefetch = 0 : i64, scratch_operands = 0 : i64, tpu.core_type = #tpu.core_type<tc>, window_params = [{transform_indices = @transform_0, window_bounds = array<i64: 8, 128>}, {pipeline_mode = #tpu.pipeline_mode<synchronous>, transform_indices = @transform_1, window_bounds = array<i64: 9, 8, 8>}, {pipeline_mode = #tpu.pipeline_mode<synchronous>, transform_indices = @transform_2, window_bounds = array<i64: 8, 1>}, {pipeline_mode = #tpu.pipeline_mode<synchronous>, transform_indices = @transform_3, window_bounds = array<i64: 9, 1, 128>}, {pipeline_mode = #tpu.pipeline_mode<synchronous>, transform_indices = @transform_4, window_bounds = array<i64: 8, 1>}, {pipeline_mode = #tpu.pipeline_mode<synchronous>, transform_indices = @transform_5, window_bounds = array<i64: 8, 1>}, {transform_indices = @transform_6, window_bounds = array<i64: 1>}, {transform_indices = @transform_7, window_bounds = array<i64: 8, 128>}, {transform_indices = @transform_8, window_bounds = array<i64: 1, 8, 1>}, {transform_indices = @transform_9, window_bounds = array<i64: 1, 8, 1>}]} {
    %c0 = arith.constant 0 : index
    %c0_0 = arith.constant 0 : index
    %0 = vector.load %arg1[%c0, %c0_0] : memref<8x128xbf16, #tpu.memory_space<vmem>>, vector<8x128xbf16>
    %1 = arith.extf %0 : vector<8x128xbf16> to vector<8x128xf32>
    %c0_1 = arith.constant 0 : index
    %c0_2 = arith.constant 0 : index
    %2 = vector.load %arg5[%c0_1, %c0_2] : memref<8x1xf32, #tpu.memory_space<vmem>>, vector<8x1xf32>
    %3 = vector.broadcast %2 : vector<8x1xf32> to vector<8x128xf32>
    %4 = arith.mulf %1, %3 : vector<8x128xf32>
    %c0_3 = arith.constant 0 : index
    %c0_4 = arith.constant 0 : index
    %5 = vector.load %arg6[%c0_3, %c0_4] : memref<8x1xf32, #tpu.memory_space<vmem>>, vector<8x1xf32>
    %6 = vector.broadcast %5 : vector<8x1xf32> to vector<8x128xf32>
    %7 = arith.addf %4, %6 : vector<8x128xf32>
    %c0_5 = arith.constant 0 : index
    %8 = memref.load %arg7[%c0_5] : memref<1xf32, #tpu.memory_space<smem>>
    %cst = arith.constant 0.000000e+00 : f32
    %9 = vector.broadcast %cst : f32 to vector<8x128xf32>
    %10 = arith.cmpf oge, %7, %9 : vector<8x128xf32>
    %11 = vector.broadcast %8 : f32 to vector<8x128xf32>
    %12 = arith.mulf %11, %7 : vector<8x128xf32>
    %13 = arith.select %10, %7, %12 : vector<8x128xi1>, vector<8x128xf32>
    %cst_6 = arith.constant 0.000000e+00 : f32
    %14 = vector.broadcast %cst_6 : f32 to vector<8x128xf32>
    %c9_i32 = arith.constant 9 : i32
    %15 = tpu.dynamic_rotate %13 by %c9_i32 dim 1 : vector<8x128xf32>, i32 -> vector<8x128xf32>
    %c0_7 = arith.constant 0 : index
    %c0_8 = arith.constant 0 : index
    %c0_9 = arith.constant 0 : index
    %16 = vector.load %arg2[%c0_7, %c0_8, %c0_9] : memref<9x8x8xf32, #tpu.memory_space<vmem>>, vector<1x8x8xf32>
    %17 = vector.shape_cast %16 : vector<1x8x8xf32> to vector<8x8xf32>
    %cst_10 = arith.constant dense<0.000000e+00> : vector<8x128xf32>
    %18 = tpu.matmul %17, %15, %cst_10 {dimension_numbers = #tpu.dot_dimension_numbers<[1], [0], [0], [1], [0, 0, 1, 1], [], []>} : vector<8x8xf32>, vector<8x128xf32>, vector<8x128xf32> -> vector<8x128xf32>
    %c0_11 = arith.constant 0 : index
    %c0_12 = arith.constant 0 : index
    %c0_13 = arith.constant 0 : index
    %19 = vector.load %arg4[%c0_11, %c0_12, %c0_13] : memref<9x1x128xf32, #tpu.memory_space<vmem>>, vector<1x1x128xf32>
    %20 = vector.shape_cast %19 : vector<1x1x128xf32> to vector<1x128xf32>
    %21 = vector.broadcast %20 : vector<1x128xf32> to vector<8x128xf32>
    %22 = arith.mulf %18, %21 : vector<8x128xf32>
    %23 = arith.addf %14, %22 : vector<8x128xf32>
    %c8_i32 = arith.constant 8 : i32
    %24 = tpu.dynamic_rotate %13 by %c8_i32 dim 1 : vector<8x128xf32>, i32 -> vector<8x128xf32>
    %c1 = arith.constant 1 : index
    %c0_14 = arith.constant 0 : index
    %c0_15 = arith.constant 0 : index
    %25 = vector.load %arg2[%c1, %c0_14, %c0_15] : memref<9x8x8xf32, #tpu.memory_space<vmem>>, vector<1x8x8xf32>
    %26 = vector.shape_cast %25 : vector<1x8x8xf32> to vector<8x8xf32>
    %cst_16 = arith.constant dense<0.000000e+00> : vector<8x128xf32>
    %27 = tpu.matmul %26, %24, %cst_16 {dimension_numbers = #tpu.dot_dimension_numbers<[1], [0], [0], [1], [0, 0, 1, 1], [], []>} : vector<8x8xf32>, vector<8x128xf32>, vector<8x128xf32> -> vector<8x128xf32>
    %c1_17 = arith.constant 1 : index
    %c0_18 = arith.constant 0 : index
    %c0_19 = arith.constant 0 : index
    %28 = vector.load %arg4[%c1_17, %c0_18, %c0_19] : memref<9x1x128xf32, #tpu.memory_space<vmem>>, vector<1x1x128xf32>
    %29 = vector.shape_cast %28 : vector<1x1x128xf32> to vector<1x128xf32>
    %30 = vector.broadcast %29 : vector<1x128xf32> to vector<8x128xf32>
    %31 = arith.mulf %27, %30 : vector<8x128xf32>
    %32 = arith.addf %23, %31 : vector<8x128xf32>
    %c7_i32 = arith.constant 7 : i32
    %33 = tpu.dynamic_rotate %13 by %c7_i32 dim 1 : vector<8x128xf32>, i32 -> vector<8x128xf32>
    %c2 = arith.constant 2 : index
    %c0_20 = arith.constant 0 : index
    %c0_21 = arith.constant 0 : index
    %34 = vector.load %arg2[%c2, %c0_20, %c0_21] : memref<9x8x8xf32, #tpu.memory_space<vmem>>, vector<1x8x8xf32>
    %35 = vector.shape_cast %34 : vector<1x8x8xf32> to vector<8x8xf32>
    %cst_22 = arith.constant dense<0.000000e+00> : vector<8x128xf32>
    %36 = tpu.matmul %35, %33, %cst_22 {dimension_numbers = #tpu.dot_dimension_numbers<[1], [0], [0], [1], [0, 0, 1, 1], [], []>} : vector<8x8xf32>, vector<8x128xf32>, vector<8x128xf32> -> vector<8x128xf32>
    %c2_23 = arith.constant 2 : index
    %c0_24 = arith.constant 0 : index
    %c0_25 = arith.constant 0 : index
    %37 = vector.load %arg4[%c2_23, %c0_24, %c0_25] : memref<9x1x128xf32, #tpu.memory_space<vmem>>, vector<1x1x128xf32>
    %38 = vector.shape_cast %37 : vector<1x1x128xf32> to vector<1x128xf32>
    %39 = vector.broadcast %38 : vector<1x128xf32> to vector<8x128xf32>
    %40 = arith.mulf %36, %39 : vector<8x128xf32>
    %41 = arith.addf %32, %40 : vector<8x128xf32>
    %c1_i32 = arith.constant 1 : i32
    %42 = tpu.dynamic_rotate %13 by %c1_i32 dim 1 : vector<8x128xf32>, i32 -> vector<8x128xf32>
    %c3 = arith.constant 3 : index
    %c0_26 = arith.constant 0 : index
    %c0_27 = arith.constant 0 : index
    %43 = vector.load %arg2[%c3, %c0_26, %c0_27] : memref<9x8x8xf32, #tpu.memory_space<vmem>>, vector<1x8x8xf32>
    %44 = vector.shape_cast %43 : vector<1x8x8xf32> to vector<8x8xf32>
    %cst_28 = arith.constant dense<0.000000e+00> : vector<8x128xf32>
    %45 = tpu.matmul %44, %42, %cst_28 {dimension_numbers = #tpu.dot_dimension_numbers<[1], [0], [0], [1], [0, 0, 1, 1], [], []>} : vector<8x8xf32>, vector<8x128xf32>, vector<8x128xf32> -> vector<8x128xf32>
    %c3_29 = arith.constant 3 : index
    %c0_30 = arith.constant 0 : index
    %c0_31 = arith.constant 0 : index
    %46 = vector.load %arg4[%c3_29, %c0_30, %c0_31] : memref<9x1x128xf32, #tpu.memory_space<vmem>>, vector<1x1x128xf32>
    %47 = vector.shape_cast %46 : vector<1x1x128xf32> to vector<1x128xf32>
    %48 = vector.broadcast %47 : vector<1x128xf32> to vector<8x128xf32>
    %49 = arith.mulf %45, %48 : vector<8x128xf32>
    %50 = arith.addf %41, %49 : vector<8x128xf32>
    %c4 = arith.constant 4 : index
    %c0_32 = arith.constant 0 : index
    %c0_33 = arith.constant 0 : index
    %51 = vector.load %arg2[%c4, %c0_32, %c0_33] : memref<9x8x8xf32, #tpu.memory_space<vmem>>, vector<1x8x8xf32>
    %52 = vector.shape_cast %51 : vector<1x8x8xf32> to vector<8x8xf32>
    %cst_34 = arith.constant dense<0.000000e+00> : vector<8x128xf32>
    %53 = tpu.matmul %52, %13, %cst_34 {dimension_numbers = #tpu.dot_dimension_numbers<[1], [0], [0], [1], [0, 0, 1, 1], [], []>} : vector<8x8xf32>, vector<8x128xf32>, vector<8x128xf32> -> vector<8x128xf32>
    %54 = arith.addf %50, %53 : vector<8x128xf32>
    %c127_i32 = arith.constant 127 : i32
    %55 = tpu.dynamic_rotate %13 by %c127_i32 dim 1 : vector<8x128xf32>, i32 -> vector<8x128xf32>
    %c5 = arith.constant 5 : index
    %c0_35 = arith.constant 0 : index
    %c0_36 = arith.constant 0 : index
    %56 = vector.load %arg2[%c5, %c0_35, %c0_36] : memref<9x8x8xf32, #tpu.memory_space<vmem>>, vector<1x8x8xf32>
    %57 = vector.shape_cast %56 : vector<1x8x8xf32> to vector<8x8xf32>
    %cst_37 = arith.constant dense<0.000000e+00> : vector<8x128xf32>
    %58 = tpu.matmul %57, %55, %cst_37 {dimension_numbers = #tpu.dot_dimension_numbers<[1], [0], [0], [1], [0, 0, 1, 1], [], []>} : vector<8x8xf32>, vector<8x128xf32>, vector<8x128xf32> -> vector<8x128xf32>
    %c5_38 = arith.constant 5 : index
    %c0_39 = arith.constant 0 : index
    %c0_40 = arith.constant 0 : index
    %59 = vector.load %arg4[%c5_38, %c0_39, %c0_40] : memref<9x1x128xf32, #tpu.memory_space<vmem>>, vector<1x1x128xf32>
    %60 = vector.shape_cast %59 : vector<1x1x128xf32> to vector<1x128xf32>
    %61 = vector.broadcast %60 : vector<1x128xf32> to vector<8x128xf32>
    %62 = arith.mulf %58, %61 : vector<8x128xf32>
    %63 = arith.addf %54, %62 : vector<8x128xf32>
    %c121_i32 = arith.constant 121 : i32
    %64 = tpu.dynamic_rotate %13 by %c121_i32 dim 1 : vector<8x128xf32>, i32 -> vector<8x128xf32>
    %c6 = arith.constant 6 : index
    %c0_41 = arith.constant 0 : index
    %c0_42 = arith.constant 0 : index
    %65 = vector.load %arg2[%c6, %c0_41, %c0_42] : memref<9x8x8xf32, #tpu.memory_space<vmem>>, vector<1x8x8xf32>
    %66 = vector.shape_cast %65 : vector<1x8x8xf32> to vector<8x8xf32>
    %cst_43 = arith.constant dense<0.000000e+00> : vector<8x128xf32>
    %67 = tpu.matmul %66, %64, %cst_43 {dimension_numbers = #tpu.dot_dimension_numbers<[1], [0], [0], [1], [0, 0, 1, 1], [], []>} : vector<8x8xf32>, vector<8x128xf32>, vector<8x128xf32> -> vector<8x128xf32>
    %c6_44 = arith.constant 6 : index
    %c0_45 = arith.constant 0 : index
    %c0_46 = arith.constant 0 : index
    %68 = vector.load %arg4[%c6_44, %c0_45, %c0_46] : memref<9x1x128xf32, #tpu.memory_space<vmem>>, vector<1x1x128xf32>
    %69 = vector.shape_cast %68 : vector<1x1x128xf32> to vector<1x128xf32>
    %70 = vector.broadcast %69 : vector<1x128xf32> to vector<8x128xf32>
    %71 = arith.mulf %67, %70 : vector<8x128xf32>
    %72 = arith.addf %63, %71 : vector<8x128xf32>
    %c120_i32 = arith.constant 120 : i32
    %73 = tpu.dynamic_rotate %13 by %c120_i32 dim 1 : vector<8x128xf32>, i32 -> vector<8x128xf32>
    %c7 = arith.constant 7 : index
    %c0_47 = arith.constant 0 : index
    %c0_48 = arith.constant 0 : index
    %74 = vector.load %arg2[%c7, %c0_47, %c0_48] : memref<9x8x8xf32, #tpu.memory_space<vmem>>, vector<1x8x8xf32>
    %75 = vector.shape_cast %74 : vector<1x8x8xf32> to vector<8x8xf32>
    %cst_49 = arith.constant dense<0.000000e+00> : vector<8x128xf32>
    %76 = tpu.matmul %75, %73, %cst_49 {dimension_numbers = #tpu.dot_dimension_numbers<[1], [0], [0], [1], [0, 0, 1, 1], [], []>} : vector<8x8xf32>, vector<8x128xf32>, vector<8x128xf32> -> vector<8x128xf32>
    %c7_50 = arith.constant 7 : index
    %c0_51 = arith.constant 0 : index
    %c0_52 = arith.constant 0 : index
    %77 = vector.load %arg4[%c7_50, %c0_51, %c0_52] : memref<9x1x128xf32, #tpu.memory_space<vmem>>, vector<1x1x128xf32>
    %78 = vector.shape_cast %77 : vector<1x1x128xf32> to vector<1x128xf32>
    %79 = vector.broadcast %78 : vector<1x128xf32> to vector<8x128xf32>
    %80 = arith.mulf %76, %79 : vector<8x128xf32>
    %81 = arith.addf %72, %80 : vector<8x128xf32>
    %c119_i32 = arith.constant 119 : i32
    %82 = tpu.dynamic_rotate %13 by %c119_i32 dim 1 : vector<8x128xf32>, i32 -> vector<8x128xf32>
    %c8 = arith.constant 8 : index
    %c0_53 = arith.constant 0 : index
    %c0_54 = arith.constant 0 : index
    %83 = vector.load %arg2[%c8, %c0_53, %c0_54] : memref<9x8x8xf32, #tpu.memory_space<vmem>>, vector<1x8x8xf32>
    %84 = vector.shape_cast %83 : vector<1x8x8xf32> to vector<8x8xf32>
    %cst_55 = arith.constant dense<0.000000e+00> : vector<8x128xf32>
    %85 = tpu.matmul %84, %82, %cst_55 {dimension_numbers = #tpu.dot_dimension_numbers<[1], [0], [0], [1], [0, 0, 1, 1], [], []>} : vector<8x8xf32>, vector<8x128xf32>, vector<8x128xf32> -> vector<8x128xf32>
    %c8_56 = arith.constant 8 : index
    %c0_57 = arith.constant 0 : index
    %c0_58 = arith.constant 0 : index
    %86 = vector.load %arg4[%c8_56, %c0_57, %c0_58] : memref<9x1x128xf32, #tpu.memory_space<vmem>>, vector<1x1x128xf32>
    %87 = vector.shape_cast %86 : vector<1x1x128xf32> to vector<1x128xf32>
    %88 = vector.broadcast %87 : vector<1x128xf32> to vector<8x128xf32>
    %89 = arith.mulf %85, %88 : vector<8x128xf32>
    %90 = arith.addf %81, %89 : vector<8x128xf32>
    %c0_59 = arith.constant 0 : index
    %c0_60 = arith.constant 0 : index
    %91 = vector.load %arg3[%c0_59, %c0_60] : memref<8x1xf32, #tpu.memory_space<vmem>>, vector<8x1xf32>
    %92 = vector.broadcast %91 : vector<8x1xf32> to vector<8x128xf32>
    %93 = arith.addf %90, %92 : vector<8x128xf32>
    %94 = arith.truncf %93 : vector<8x128xf32> to vector<8x128xbf16>
    %c0_61 = arith.constant 0 : index
    %c0_62 = arith.constant 0 : index
    %95 = vector.load %arg8[%c0_61, %c0_62] : memref<8x128xbf16, #tpu.memory_space<vmem>>, vector<8x128xbf16>
    tpu.vector_store %arg8[%c0_61, %c0_62], %94 {strides = array<i32>} : memref<8x128xbf16, #tpu.memory_space<vmem>>, vector<8x128xbf16>,
    %cst_63 = arith.constant dense<0.000000e+00> : vector<8xf32>
    %96 = vector.multi_reduction <add>, %93, %cst_63 [1] : vector<8x128xf32> to vector<8xf32>
    %97 = vector.shape_cast %96 : vector<8xf32> to vector<8x1xf32>
    %c0_64 = arith.constant 0 : index
    %c0_65 = arith.constant 0 : index
    %c0_66 = arith.constant 0 : index
    %98 = vector.load %arg9[%c0_64, %c0_65, %c0_66] : memref<1x8x1xf32, #tpu.memory_space<vmem>>, vector<1x8x1xf32>
    %99 = vector.shape_cast %98 : vector<1x8x1xf32> to vector<8x1xf32>
    %100 = vector.shape_cast %97 : vector<8x1xf32> to vector<1x8x1xf32>
    tpu.vector_store %arg9[%c0_64, %c0_65, %c0_66], %100 {strides = array<i32>} : memref<1x8x1xf32, #tpu.memory_space<vmem>>, vector<1x8x1xf32>,
    %101 = arith.mulf %93, %93 : vector<8x128xf32>
    %cst_67 = arith.constant dense<0.000000e+00> : vector<8xf32>
    %102 = vector.multi_reduction <add>, %101, %cst_67 [1] : vector<8x128xf32> to vector<8xf32>
    %103 = vector.shape_cast %102 : vector<8xf32> to vector<8x1xf32>
    %c0_68 = arith.constant 0 : index
    %c0_69 = arith.constant 0 : index
    %c0_70 = arith.constant 0 : index
    %104 = vector.load %arg10[%c0_68, %c0_69, %c0_70] : memref<1x8x1xf32, #tpu.memory_space<vmem>>, vector<1x8x1xf32>
    %105 = vector.shape_cast %104 : vector<1x8x1xf32> to vector<8x1xf32>
    %106 = vector.shape_cast %103 : vector<8x1xf32> to vector<1x8x1xf32>
    tpu.vector_store %arg10[%c0_68, %c0_69, %c0_70], %106 {strides = array<i32>} : memref<1x8x1xf32, #tpu.memory_space<vmem>>, vector<1x8x1xf32>,
    return
  }
  func.func @transform_0(%arg0: i32) -> (i32, i32) {
    %c0_i32 = arith.constant 0 : i32
    %c0_i32_0 = arith.constant 0 : i32
    return %c0_i32, %arg0 : i32, i32
  }
  func.func @transform_1(%arg0: i32) -> (i32, i32, i32) {
    %c0_i32 = arith.constant 0 : i32
    %c0_i32_0 = arith.constant 0 : i32
    %c0_i32_1 = arith.constant 0 : i32
    %c0_i32_2 = arith.constant 0 : i32
    return %c0_i32, %c0_i32_0, %c0_i32_1 : i32, i32, i32
  }
  func.func @transform_2(%arg0: i32) -> (i32, i32) {
    %c0_i32 = arith.constant 0 : i32
    %c0_i32_0 = arith.constant 0 : i32
    %c0_i32_1 = arith.constant 0 : i32
    return %c0_i32, %c0_i32_0 : i32, i32
  }
  func.func @transform_3(%arg0: i32) -> (i32, i32, i32) {
    %c0_i32 = arith.constant 0 : i32
    %c0_i32_0 = arith.constant 0 : i32
    %c0_i32_1 = arith.constant 0 : i32
    %c0_i32_2 = arith.constant 0 : i32
    return %c0_i32, %c0_i32_0, %c0_i32_1 : i32, i32, i32
  }
  func.func @transform_4(%arg0: i32) -> (i32, i32) {
    %c0_i32 = arith.constant 0 : i32
    %c0_i32_0 = arith.constant 0 : i32
    %c0_i32_1 = arith.constant 0 : i32
    return %c0_i32, %c0_i32_0 : i32, i32
  }
  func.func @transform_5(%arg0: i32) -> (i32, i32) {
    %c0_i32 = arith.constant 0 : i32
    %c0_i32_0 = arith.constant 0 : i32
    %c0_i32_1 = arith.constant 0 : i32
    return %c0_i32, %c0_i32_0 : i32, i32
  }
  func.func @transform_6(%arg0: i32) -> i32 {
    %c0_i32 = arith.constant 0 : i32
    %c0_i32_0 = arith.constant 0 : i32
    return %c0_i32 : i32
  }
  func.func @transform_7(%arg0: i32) -> (i32, i32) {
    %c0_i32 = arith.constant 0 : i32
    %c0_i32_0 = arith.constant 0 : i32
    return %c0_i32, %arg0 : i32, i32
  }
  func.func @transform_8(%arg0: i32) -> (i32, i32, i32) {
    %c0_i32 = arith.constant 0 : i32
    %c0_i32_0 = arith.constant 0 : i32
    %c0_i32_1 = arith.constant 0 : i32
    return %arg0, %c0_i32, %c0_i32_0 : i32, i32, i32
  }
  func.func @transform_9(%arg0: i32) -> (i32, i32, i32) {
    %c0_i32 = arith.constant 0 : i32
    %c0_i32_0 = arith.constant 0 : i32
    %c0_i32_1 = arith.constant 0 : i32
    return %arg0, %c0_i32, %c0_i32_0 : i32, i32, i32
  }
}

</mosaic_0001>

<llo_original>
// kernel: event_encoder_forward.5
$region0: #{event_encoder_forward.5}
  #allocation0 [shape = 'u32[]', space=smem, size = 0x4, offset = 0x4, fixed_abs, tag = 'smem constant byte address 0x4 - core index']
  #allocation1 [shape = 'u32[144,128]{1,0:T(1,128)}', space=vmem, size = 0x12000, scoped, tag = 'internal scratch']
  #allocation2 [shape = 'f32[1]{0:T(128)S(6)}', space=smem, size = 0x200, scoped, tag = 'scoped memory for event_encoder_forward.5']
  %s0 = inlined_call_operand.vmem [shape: bf16[8,128], index: 0, kind: input, shape index: {}]
  %s1 = inlined_call_operand.vmem [shape: f32[8,1], index: 1, kind: input, shape index: {}]
  %s2 = inlined_call_operand.vmem [shape: f32[8,1], index: 2, kind: input, shape index: {}]
  %s3 = inlined_call_operand.vmem [shape: bf16[8,128], index: 3, kind: input, shape index: {}]
  %s4 = inlined_call_operand.vmem [shape: f32[8,1], index: 4, kind: input, shape index: {}]
  %s5 = inlined_call_operand.vmem [shape: f32[8,1], index: 5, kind: input, shape index: {}]
  %s6 = inlined_call_operand.vmem [shape: f32[128,8], index: 6, kind: input, shape index: {}]
  %s7 = inlined_call_operand.vmem [shape: f32[8,128], index: 7, kind: input, shape index: {}]
  %s8 = inlined_call_operand.<no memory space> [shape: f32[1], index: 8, kind: input, shape index: {}]
  %s9 = inlined_call_operand.vmem [shape: f32[8,128], index: 9, kind: output, shape index: {}]
  %s10 = sld [smem:[#allocation0]]
  $region46: #{event_encoder_forward.5} parent=0
    _
  %s12 = ssub.s32 1, %s10
  %s13 = scalar_select 0, %s12, %s10
  %14 = sst [smem:[#allocation2]] %s8
  // Predicated region
  $region2: #{event_encoder_forward.5} parent=0 // pred_check
    _
  $region3: #{event_encoder_forward.5} parent=0 // pred_check_branch
    %16 = sbr.rel (0) target = $region5
  $region4: #{event_encoder_forward.5} parent=0 // pred_region
    _
  $region5: #{event_encoder_forward.5} parent=0 // pred_fallthru
    _
  // Predicated region
  $region6: #{event_encoder_forward.5} parent=0 // pred_check
    _
  $region7: #{event_encoder_forward.5} parent=0 // pred_check_branch
    %18 = sbr.rel (0) target = $region9
  $region8: #{event_encoder_forward.5} parent=0 // pred_region
    _
  $region9: #{event_encoder_forward.5} parent=0 // pred_fallthru
    _
  // Predicated region
  $region10: #{event_encoder_forward.5} parent=0 // pred_check
    _
  $region11: #{event_encoder_forward.5} parent=0 // pred_check_branch
    %20 = sbr.rel (0) target = $region13
  $region12: #{event_encoder_forward.5} parent=0 // pred_region
    _
  $region13: #{event_encoder_forward.5} parent=0 // pred_fallthru
    _
  // Predicated region
  $region14: #{event_encoder_forward.5} parent=0 // pred_check
    _
  $region15: #{event_encoder_forward.5} parent=0 // pred_check_branch
    %22 = sbr.rel (0) target = $region17
  $region16: #{event_encoder_forward.5} parent=0 // pred_region
    _
  $region17: #{event_encoder_forward.5} parent=0 // pred_fallthru
    _
  // Predicated region
  $region18: #{event_encoder_forward.5} parent=0 // pred_check
    _
  $region19: #{event_encoder_forward.5} parent=0 // pred_check_branch
    %24 = sbr.rel (0) target = $region21
  $region20: #{event_encoder_forward.5} parent=0 // pred_region
    _
  $region21: #{event_encoder_forward.5} parent=0 // pred_fallthru
    _
  // Predicated region
  $region22: #{event_encoder_forward.5} parent=0 // pred_check
    _
  $region23: #{event_encoder_forward.5} parent=0 // pred_check_branch
    %26 = sbr.rel (0) target = $region25
  $region24: #{event_encoder_forward.5} parent=0 // pred_region
    _
  $region25: #{event_encoder_forward.5} parent=0 // pred_fallthru
    _
  // Predicated region
  $region26: #{event_encoder_forward.5} parent=0 // pred_check
    _
  $region27: #{event_encoder_forward.5} parent=0 // pred_check_branch
    %28 = sbr.rel (0) target = $region29
  $region28: #{event_encoder_forward.5} parent=0 // pred_region
    _
  $region29: #{event_encoder_forward.5} parent=0 // pred_fallthru
    _
  // Predicated region
  $region30: #{event_encoder_forward.5} parent=0 // pred_check
    _
  $region31: #{event_encoder_forward.5} parent=0 // pred_check_branch
    %30 = sbr.rel (0) target = $region33
  $region32: #{event_encoder_forward.5} parent=0 // pred_region
    _
  $region33: #{event_encoder_forward.5} parent=0 // pred_fallthru
    _
  // Predicated region
  $region34: #{event_encoder_forward.5} parent=0 // pred_check
    _
  $region35: #{event_encoder_forward.5} parent=0 // pred_check_branch
    %32 = sbr.rel (0) target = $region37
  $region36: #{event_encoder_forward.5} parent=0 // pred_region
    _
  $region37: #{event_encoder_forward.5} parent=0 // pred_fallthru
    _
  %v33 = vld [vmem:[%s0] sm:$0xf]
  %v34 = vunpack.c.l.bf16 %v33
  %v35 = vld [vmem:[%s1] sm:$0xff]
  %37 = vset.pattern.permute.xlu0 0
  %38 = vperm.xlu0 %37, %v35
  %v39 = vpop.permute.xlu0 %38
  %v41 = vmul.f32 %v34, %v39
  %v42 = vld [vmem:[%s2] sm:$0xff]
  %44 = vset.pattern.permute.xlu0 0
  %45 = vperm.xlu0 %44, %v42
  %v46 = vpop.permute.xlu0 %45
  %v48 = vadd.f32 %v41, %v46
  %v49 = vld [vmem:[%s3] sm:$0xf]
  %v50 = vunpack.c.l.bf16 %v49
  %v51 = vld [vmem:[%s4] sm:$0xff]
  %53 = vset.pattern.permute.xlu0 0
  %54 = vperm.xlu0 %53, %v51
  %v55 = vpop.permute.xlu0 %54
  %v57 = vmul.f32 %v50, %v55
  %v58 = vld [vmem:[%s5] sm:$0xff]
  %60 = vset.pattern.permute.xlu0 0
  %61 = vperm.xlu0 %60, %v58
  %v62 = vpop.permute.xlu0 %61
  %v64 = vadd.f32 %v57, %v62
  %v65 = vadd.f32 %v48, %v64
  %v66 = vld [vmem:[%s6] sm:$0xff]
  %v67 = vld [vmem:[%s6 + $0x8] sm:$0xff]
  %v68 = vld [vmem:[%s6 + $0x10] sm:$0xff]
  %v69 = vld [vmem:[%s6 + $0x18] sm:$0xff]
  %v70 = vld [vmem:[%s6 + $0x20] sm:$0xff]
  %v71 = vld [vmem:[%s6 + $0x28] sm:$0xff]
  %v72 = vld [vmem:[%s6 + $0x30] sm:$0xff]
  %v73 = vld [vmem:[%s6 + $0x38] sm:$0xff]
  %v74 = vld [vmem:[%s6 + $0x40] sm:$0xff]
  %v75 = vld [vmem:[%s6 + $0x48] sm:$0xff]
  %v76 = vld [vmem:[%s6 + $0x50] sm:$0xff]
  %v77 = vld [vmem:[%s6 + $0x58] sm:$0xff]
  %v78 = vld [vmem:[%s6 + $0x60] sm:$0xff]
  %v79 = vld [vmem:[%s6 + $0x68] sm:$0xff]
  %v80 = vld [vmem:[%s6 + $0x70] sm:$0xff]
  %v81 = vld [vmem:[%s6 + $0x78] sm:$0xff]
  %82 = vmatprep.subr.mxu0 0.0
  %83 = vmatpush1.msra.mxu0 %v66
  %84 = vmatprep.subr.mxu0 0.0
  %85 = vmatpush1.msra.mxu0 %v67
  %86 = vmatprep.subr.mxu0 0.0
  %87 = vmatpush1.msra.mxu0 %v68
  %88 = vmatprep.subr.mxu0 0.0
  %89 = vmatpush1.msra.mxu0 %v69
  %90 = vmatprep.subr.mxu0 0.0
  %91 = vmatpush1.msra.mxu0 %v70
  %92 = vmatprep.subr.mxu0 0.0
  %93 = vmatpush1.msra.mxu0 %v71
  %94 = vmatprep.subr.mxu0 0.0
  %95 = vmatpush1.msra.mxu0 %v72
  %96 = vmatprep.subr.mxu0 0.0
  %97 = vmatpush1.msra.mxu0 %v73
  %98 = vmatprep.subr.mxu0 0.0
  %99 = vmatpush1.msra.mxu0 %v74
  %100 = vmatprep.subr.mxu0 0.0
  %101 = vmatpush1.msra.mxu0 %v75
  %102 = vmatprep.subr.mxu0 0.0
  %103 = vmatpush1.msra.mxu0 %v76
  %104 = vmatprep.subr.mxu0 0.0
  %105 = vmatpush1.msra.mxu0 %v77
  %106 = vmatprep.subr.mxu0 0.0
  %107 = vmatpush1.msra.mxu0 %v78
  %108 = vmatprep.subr.mxu0 0.0
  %109 = vmatpush1.msra.mxu0 %v79
  %110 = vmatprep.subr.mxu0 0.0
  %111 = vmatpush1.msra.mxu0 %v80
  %112 = vmatprep.subr.mxu0 0.0
  %113 = vmatpush1.msra.mxu0 %v81
  %114 = vmatprep.subr.mxu0 0.0
  %115 = vmatpush1.msra.mxu0 0.0
  %116 = vmatprep.subr.mxu0 0.0
  %117 = vmatpush1.msra.mxu0 0.0
  %118 = vmatprep.subr.mxu0 0.0
  %119 = vmatpush1.msra.mxu0 0.0
  %120 = vmatprep.subr.mxu0 0.0
  %121 = vmatpush1.msra.mxu0 0.0
  %122 = vmatprep.subr.mxu0 0.0
  %123 = vmatpush1.msra.mxu0 0.0
  %124 = vmatprep.subr.mxu0 0.0
  %125 = vmatpush1.msra.mxu0 0.0
  %126 = vmatprep.subr.mxu0 0.0
  %127 = vmatpush1.msra.mxu0 0.0
  %128 = vmatprep.subr.mxu0 0.0
  %129 = vmatpush1.msra.mxu0 0.0
  %130 = vmatprep.subr.mxu0 0.0
  %131 = vmatpush1.msra.mxu0 0.0
  %132 = vmatprep.subr.mxu0 0.0
  %133 = vmatpush1.msra.mxu0 0.0
  %134 = vmatprep.subr.mxu0 0.0
  %135 = vmatpush1.msra.mxu0 0.0
  %136 = vmatprep.subr.mxu0 0.0
  %137 = vmatpush1.msra.mxu0 0.0
  %138 = vmatprep.subr.mxu0 0.0
  %139 = vmatpush1.msra.mxu0 0.0
  %140 = vmatprep.subr.mxu0 0.0
  %141 = vmatpush1.msra.mxu0 0.0
  %142 = vmatprep.subr.mxu0 0.0
  %143 = vmatpush1.msra.mxu0 0.0
  %144 = vmatprep.subr.mxu0 0.0
  %145 = vmatpush1.msra.mxu0 0.0
  %146 = vmatprep.mubr.f32.mxu0 0.0
  %147 = vmatmul.mubr.f32.gmra.mrb[0].mxu0 %v65
  %v148 = vpop.f32.mrb[0].mxu0
  %v149 = vadd.f32 0.0, %v148
  %v150 = vpop.f32.mrb[0].mxu0
  %151 = vdwg.mxu0
  %v152 = vmul.f32 %v149, 0.015625
  %v153 = vmul.f32 %v65, %v65
  %154 = vmatprep.subr.mxu0 0.0
  %155 = vmatpush1.msra.mxu0 %v66
  %156 = vmatprep.subr.mxu0 0.0
  %157 = vmatpush1.msra.mxu0 %v67
  %158 = vmatprep.subr.mxu0 0.0
  %159 = vmatpush1.msra.mxu0 %v68
  %160 = vmatprep.subr.mxu0 0.0
  %161 = vmatpush1.msra.mxu0 %v69
  %162 = vmatprep.subr.mxu0 0.0
  %163 = vmatpush1.msra.mxu0 %v70
  %164 = vmatprep.subr.mxu0 0.0
  %165 = vmatpush1.msra.mxu0 %v71
  %166 = vmatprep.subr.mxu0 0.0
  %167 = vmatpush1.msra.mxu0 %v72
  %168 = vmatprep.subr.mxu0 0.0
  %169 = vmatpush1.msra.mxu0 %v73
  %170 = vmatprep.subr.mxu0 0.0
  %171 = vmatpush1.msra.mxu0 %v74
  %172 = vmatprep.subr.mxu0 0.0
  %173 = vmatpush1.msra.mxu0 %v75
  %174 = vmatprep.subr.mxu0 0.0
  %175 = vmatpush1.msra.mxu0 %v76
  %176 = vmatprep.subr.mxu0 0.0
  %177 = vmatpush1.msra.mxu0 %v77
  %178 = vmatprep.subr.mxu0 0.0
  %179 = vmatpush1.msra.mxu0 %v78
  %180 = vmatprep.subr.mxu0 0.0
  %181 = vmatpush1.msra.mxu0 %v79
  %182 = vmatprep.subr.mxu0 0.0
  %183 = vmatpush1.msra.mxu0 %v80
  %184 = vmatprep.subr.mxu0 0.0
  %185 = vmatpush1.msra.mxu0 %v81
  %186 = vmatprep.subr.mxu0 0.0
  %187 = vmatpush1.msra.mxu0 0.0
  %188 = vmatprep.subr.mxu0 0.0
  %189 = vmatpush1.msra.mxu0 0.0
  %190 = vmatprep.subr.mxu0 0.0
  %191 = vmatpush1.msra.mxu0 0.0
  %192 = vmatprep.subr.mxu0 0.0
  %193 = vmatpush1.msra.mxu0 0.0
  %194 = vmatprep.subr.mxu0 0.0
  %195 = vmatpush1.msra.mxu0 0.0
  %196 = vmatprep.subr.mxu0 0.0
  %197 = vmatpush1.msra.mxu0 0.0
  %198 = vmatprep.subr.mxu0 0.0
  %199 = vmatpush1.msra.mxu0 0.0
  %200 = vmatprep.subr.mxu0 0.0
  %201 = vmatpush1.msra.mxu0 0.0
  %202 = vmatprep.subr.mxu0 0.0
  %203 = vmatpush1.msra.mxu0 0.0
  %204 = vmatprep.subr.mxu0 0.0
  %205 = vmatpush1.msra.mxu0 0.0
  %206 = vmatprep.subr.mxu0 0.0
  %207 = vmatpush1.msra.mxu0 0.0
  %208 = vmatprep.subr.mxu0 0.0
  %209 = vmatpush1.msra.mxu0 0.0
  %210 = vmatprep.subr.mxu0 0.0
  %211 = vmatpush1.msra.mxu0 0.0
  %212 = vmatprep.subr.mxu0 0.0
  %213 = vmatpush1.msra.mxu0 0.0
  %214 = vmatprep.subr.mxu0 0.0
  %215 = vmatpush1.msra.mxu0 0.0
  %216 = vmatprep.subr.mxu0 0.0
  %217 = vmatpush1.msra.mxu0 0.0
  %218 = vmatprep.mubr.f32.mxu0 0.0
  %219 = vmatmul.mubr.f32.gmra.mrb[0].mxu0 %v153
  %v220 = vpop.f32.mrb[0].mxu0
  %v221 = vadd.f32 0.0, %v220
  %v222 = vpop.f32.mrb[0].mxu0
  %223 = vdwg.mxu0
  %v224 = vmul.f32 %v221, 0.015625
  %v225 = vmul.f32 %v152, %v152
  %v226 = vsub.f32 %v224, %v225
  %v227 = vmax.f32 %v226, 0.0
  %v228 = vadd.f32 %v227, 1e-05
  %v229 = vrsqrt.pop %v228
  %v230 = vld [vmem:[%s7] sm:$0xff]
  %vm231 = vcmask 64512
  %v233 = vsel %vm231, %v152, 0
  %235 = vmatprep.subr.mxu0 0.0
  %236 = vmatpush1.msra.mxu0 %v230
  %237 = vmatprep.subr.mxu0 0.0
  %238 = vmatpush1.msra.mxu0 0.0
  %239 = vmatprep.subr.mxu0 0.0
  %240 = vmatpush1.msra.mxu0 0.0
  %241 = vmatprep.subr.mxu0 0.0
  %242 = vmatpush1.msra.mxu0 0.0
  %243 = vmatprep.subr.mxu0 0.0
  %244 = vmatpush1.msra.mxu0 0.0
  %245 = vmatprep.subr.mxu0 0.0
  %246 = vmatpush1.msra.mxu0 0.0
  %247 = vmatprep.subr.mxu0 0.0
  %248 = vmatpush1.msra.mxu0 0.0
  %249 = vmatprep.subr.mxu0 0.0
  %250 = vmatpush1.msra.mxu0 0.0
  %251 = vmatprep.subr.mxu0 0.0
  %252 = vmatpush1.msra.mxu0 0.0
  %253 = vmatprep.subr.mxu0 0.0
  %254 = vmatpush1.msra.mxu0 0.0
  %255 = vmatprep.subr.mxu0 0.0
  %256 = vmatpush1.msra.mxu0 0.0
  %257 = vmatprep.subr.mxu0 0.0
  %258 = vmatpush1.msra.mxu0 0.0
  %259 = vmatprep.subr.mxu0 0.0
  %260 = vmatpush1.msra.mxu0 0.0
  %261 = vmatprep.subr.mxu0 0.0
  %262 = vmatpush1.msra.mxu0 0.0
  %263 = vmatprep.subr.mxu0 0.0
  %264 = vmatpush1.msra.mxu0 0.0
  %265 = vmatprep.subr.mxu0 0.0
  %266 = vmatpush1.msra.mxu0 0.0
  %267 = vmatprep.subr.mxu0 0.0
  %268 = vmatpush1.msra.mxu0 0.0
  %269 = vmatprep.subr.mxu0 0.0
  %270 = vmatpush1.msra.mxu0 0.0
  %271 = vmatprep.subr.mxu0 0.0
  %272 = vmatpush1.msra.mxu0 0.0
  %273 = vmatprep.subr.mxu0 0.0
  %274 = vmatpush1.msra.mxu0 0.0
  %275 = vmatprep.subr.mxu0 0.0
  %276 = vmatpush1.msra.mxu0 0.0
  %277 = vmatprep.subr.mxu0 0.0
  %278 = vmatpush1.msra.mxu0 0.0
  %279 = vmatprep.subr.mxu0 0.0
  %280 = vmatpush1.msra.mxu0 0.0
  %281 = vmatprep.subr.mxu0 0.0
  %282 = vmatpush1.msra.mxu0 0.0
  %283 = vmatprep.subr.mxu0 0.0
  %284 = vmatpush1.msra.mxu0 0.0
  %285 = vmatprep.subr.mxu0 0.0
  %286 = vmatpush1.msra.mxu0 0.0
  %287 = vmatprep.subr.mxu0 0.0
  %288 = vmatpush1.msra.mxu0 0.0
  %289 = vmatprep.subr.mxu0 0.0
  %290 = vmatpush1.msra.mxu0 0.0
  %291 = vmatprep.subr.mxu0 0.0
  %292 = vmatpush1.msra.mxu0 0.0
  %293 = vmatprep.subr.mxu0 0.0
  %294 = vmatpush1.msra.mxu0 0.0
  %295 = vmatprep.subr.mxu0 0.0
  %296 = vmatpush1.msra.mxu0 0.0
  %297 = vmatprep.subr.mxu0 0.0
  %298 = vmatpush1.msra.mxu0 0.0
  %299 = vmatprep.mubr.f32.mxu0 0.0
  %300 = vmatmul.mubr.f32.gmra.mrb[0].mxu0 %v233
  %v301 = vpop.f32.mrb[0].mxu0
  %v302 = vadd.f32 0.0, %v301
  %v303 = vpop.f32.mrb[0].mxu0
  %304 = vdwg.mxu0
  %v306 = vsel %vm231, %v229, 0
  %308 = vmatprep.subr.mxu0 0.0
  %309 = vmatpush1.msra.mxu0 %v230
  %310 = vmatprep.subr.mxu0 0.0
  %311 = vmatpush1.msra.mxu0 0.0
  %312 = vmatprep.subr.mxu0 0.0
  %313 = vmatpush1.msra.mxu0 0.0
  %314 = vmatprep.subr.mxu0 0.0
  %315 = vmatpush1.msra.mxu0 0.0
  %316 = vmatprep.subr.mxu0 0.0
  %317 = vmatpush1.msra.mxu0 0.0
  %318 = vmatprep.subr.mxu0 0.0
  %319 = vmatpush1.msra.mxu0 0.0
  %320 = vmatprep.subr.mxu0 0.0
  %321 = vmatpush1.msra.mxu0 0.0
  %322 = vmatprep.subr.mxu0 0.0
  %323 = vmatpush1.msra.mxu0 0.0
  %324 = vmatprep.subr.mxu0 0.0
  %325 = vmatpush1.msra.mxu0 0.0
  %326 = vmatprep.subr.mxu0 0.0
  %327 = vmatpush1.msra.mxu0 0.0
  %328 = vmatprep.subr.mxu0 0.0
  %329 = vmatpush1.msra.mxu0 0.0
  %330 = vmatprep.subr.mxu0 0.0
  %331 = vmatpush1.msra.mxu0 0.0
  %332 = vmatprep.subr.mxu0 0.0
  %333 = vmatpush1.msra.mxu0 0.0
  %334 = vmatprep.subr.mxu0 0.0
  %335 = vmatpush1.msra.mxu0 0.0
  %336 = vmatprep.subr.mxu0 0.0
  %337 = vmatpush1.msra.mxu0 0.0
  %338 = vmatprep.subr.mxu0 0.0
  %339 = vmatpush1.msra.mxu0 0.0
  %340 = vmatprep.subr.mxu0 0.0
  %341 = vmatpush1.msra.mxu0 0.0
  %342 = vmatprep.subr.mxu0 0.0
  %343 = vmatpush1.msra.mxu0 0.0
  %344 = vmatprep.subr.mxu0 0.0
  %345 = vmatpush1.msra.mxu0 0.0
  %346 = vmatprep.subr.mxu0 0.0
  %347 = vmatpush1.msra.mxu0 0.0
  %348 = vmatprep.subr.mxu0 0.0
  %349 = vmatpush1.msra.mxu0 0.0
  %350 = vmatprep.subr.mxu0 0.0
  %351 = vmatpush1.msra.mxu0 0.0
  %352 = vmatprep.subr.mxu0 0.0
  %353 = vmatpush1.msra.mxu0 0.0
  %354 = vmatprep.subr.mxu0 0.0
  %355 = vmatpush1.msra.mxu0 0.0
  %356 = vmatprep.subr.mxu0 0.0
  %357 = vmatpush1.msra.mxu0 0.0
  %358 = vmatprep.subr.mxu0 0.0
  %359 = vmatpush1.msra.mxu0 0.0
  %360 = vmatprep.subr.mxu0 0.0
  %361 = vmatpush1.msra.mxu0 0.0
  %362 = vmatprep.subr.mxu0 0.0
  %363 = vmatpush1.msra.mxu0 0.0
  %364 = vmatprep.subr.mxu0 0.0
  %365 = vmatpush1.msra.mxu0 0.0
  %366 = vmatprep.subr.mxu0 0.0
  %367 = vmatpush1.msra.mxu0 0.0
  %368 = vmatprep.subr.mxu0 0.0
  %369 = vmatpush1.msra.mxu0 0.0
  %370 = vmatprep.subr.mxu0 0.0
  %371 = vmatpush1.msra.mxu0 0.0
  %372 = vmatprep.mubr.f32.mxu0 0.0
  %373 = vmatmul.mubr.f32.gmra.mrb[0].mxu0 %v306
  %v374 = vpop.f32.mrb[0].mxu0
  %v375 = vadd.f32 0.0, %v374
  %v376 = vpop.f32.mrb[0].mxu0
  %377 = vdwg.mxu0
  %v378 = vsub.f32 %v65, %v302
  %v379 = vmul.f32 %v378, %v375
  %s380 = sld [smem:[#allocation2]]
  %vm381 = vcmp.ge.f32.partialorder %v379, 0.0
  %v382 = vstv %s380
  %v383 = vmul.f32 %v382, %v379
  %v384 = vsel %vm381, %v379, %v383
  %385 = vst [vmem:[%s9] sm:$0xff] %v384
  // Predicated region
  $region38: #{event_encoder_forward.5} parent=0 // pred_check
    _
  $region39: #{event_encoder_forward.5} parent=0 // pred_check_branch
    %387 = sbr.rel (0) target = $region41
  $region40: #{event_encoder_forward.5} parent=0 // pred_region
    _
  $region41: #{event_encoder_forward.5} parent=0 // pred_fallthru
    _
  // Predicated region
  $region42: #{event_encoder_forward.5} parent=0 // pred_check
    _
  $region43: #{event_encoder_forward.5} parent=0 // pred_check_branch
    %389 = sbr.rel (0) target = $region45
  $region44: #{event_encoder_forward.5} parent=0 // pred_region
    _
  $region45: #{event_encoder_forward.5} parent=0 // pred_fallthru
    _

// kernel: event_encoder_forward.3
$region0: #{event_encoder_forward.3}
  #allocation0 [shape = 'u32[]', space=smem, size = 0x4, offset = 0x4, fixed_abs, tag = 'smem constant byte address 0x4 - core index']
  #allocation1 [shape = 'u32[144,128]{1,0:T(1,128)}', space=vmem, size = 0x12000, scoped, tag = 'internal scratch']
  %s0 = inlined_call_operand.vmem [shape: bf16[16,128], index: 0, kind: input, shape index: {}]
  %s1 = inlined_call_operand.vmem [shape: f32[4,8,16], index: 1, kind: input, shape index: {}]
  %s2 = inlined_call_operand.vmem [shape: f32[8,1], index: 2, kind: input, shape index: {}]
  %s3 = inlined_call_operand.vmem [shape: f32[4,1,128], index: 3, kind: input, shape index: {}]
  %s4 = inlined_call_operand.vmem [shape: f32[8,16], index: 4, kind: input, shape index: {}]
  %s5 = inlined_call_operand.vmem [shape: f32[8,1], index: 5, kind: input, shape index: {}]
  %s6 = inlined_call_operand.vmem [shape: bf16[8,128], index: 6, kind: output, shape index: {0}]
  %s7 = inlined_call_operand.vmem [shape: f32[1,8,1], index: 7, kind: output, shape index: {1}]
  %s8 = inlined_call_operand.vmem [shape: f32[1,8,1], index: 8, kind: output, shape index: {2}]
  %s9 = inlined_call_operand.vmem [shape: bf16[8,128], index: 9, kind: output, shape index: {3}]
  %s10 = inlined_call_operand.vmem [shape: f32[1,8,1], index: 10, kind: output, shape index: {4}]
  %s11 = inlined_call_operand.vmem [shape: f32[1,8,1], index: 11, kind: output, shape index: {5}]
  %12 = xla_tuple %s6, %s7, %s8, %s9, %s10, %s11
  %s13 = sld [smem:[#allocation0]]
  $region74: #{event_encoder_forward.3} parent=0
    _
  %s15 = ssub.s32 1, %s13
  %s16 = scalar_select 0, %s15, %s13
  // Predicated region
  $region2: #{event_encoder_forward.3} parent=0 // pred_check
    _
  $region3: #{event_encoder_forward.3} parent=0 // pred_check_branch
    %18 = sbr.rel (0) target = $region5
  $region4: #{event_encoder_forward.3} parent=0 // pred_region
    _
  $region5: #{event_encoder_forward.3} parent=0 // pred_fallthru
    _
  // Predicated region
  $region6: #{event_encoder_forward.3} parent=0 // pred_check
    _
  $region7: #{event_encoder_forward.3} parent=0 // pred_check_branch
    %20 = sbr.rel (0) target = $region9
  $region8: #{event_encoder_forward.3} parent=0 // pred_region
    _
  $region9: #{event_encoder_forward.3} parent=0 // pred_fallthru
    _
  // Predicated region
  $region10: #{event_encoder_forward.3} parent=0 // pred_check
    _
  $region11: #{event_encoder_forward.3} parent=0 // pred_check_branch
    %22 = sbr.rel (0) target = $region13
  $region12: #{event_encoder_forward.3} parent=0 // pred_region
    _
  $region13: #{event_encoder_forward.3} parent=0 // pred_fallthru
    _
  // Predicated region
  $region14: #{event_encoder_forward.3} parent=0 // pred_check
    _
  $region15: #{event_encoder_forward.3} parent=0 // pred_check_branch
    %24 = sbr.rel (0) target = $region17
  $region16: #{event_encoder_forward.3} parent=0 // pred_region
    _
  $region17: #{event_encoder_forward.3} parent=0 // pred_fallthru
    _
  // Predicated region
  $region18: #{event_encoder_forward.3} parent=0 // pred_check
    _
  $region19: #{event_encoder_forward.3} parent=0 // pred_check_branch
    %26 = sbr.rel (0) target = $region21
  $region20: #{event_encoder_forward.3} parent=0 // pred_region
    _
  $region21: #{event_encoder_forward.3} parent=0 // pred_fallthru
    _
  // Predicated region
  $region22: #{event_encoder_forward.3} parent=0 // pred_check
    _
  $region23: #{event_encoder_forward.3} parent=0 // pred_check_branch
    %28 = sbr.rel (0) target = $region25
  $region24: #{event_encoder_forward.3} parent=0 // pred_region
    _
  $region25: #{event_encoder_forward.3} parent=0 // pred_fallthru
    _
  %v29 = vld [vmem:[%s0] sm:$0xf]
  %v30 = vld [vmem:[%s0 + $0x4] sm:$0xf]
  %v31 = vunpack.c.l.bf16 %v29
  %v32 = vunpack.c.l.bf16 %v30
  %33 = vrot.lane.b32.xlu0 %v31, 9
  %v34 = vpop.permute.xlu0 %33
  %35 = vrot.lane.b32.xlu0 %v32, 9
  %v36 = vpop.permute.xlu0 %35
  %v37 = vld [vmem:[%s1] sm:$0xff]
  %vm38 = vcmask 130048
  %v40 = vsel %vm38, %v37, 0
  %42 = vmatprep.subr.mxu0 0.0
  %43 = vmatpush1.msra.mxu0 %v34
  %44 = vmatprep.subr.mxu0 0.0
  %45 = vmatpush1.msra.mxu0 %v36
  %46 = vmatprep.subr.mxu0 0.0
  %47 = vmatpush1.msra.mxu0 0.0
  %48 = vmatprep.subr.mxu0 0.0
  %49 = vmatpush1.msra.mxu0 0.0
  %50 = vmatprep.subr.mxu0 0.0
  %51 = vmatpush1.msra.mxu0 0.0
  %52 = vmatprep.subr.mxu0 0.0
  %53 = vmatpush1.msra.mxu0 0.0
  %54 = vmatprep.subr.mxu0 0.0
  %55 = vmatpush1.msra.mxu0 0.0
  %56 = vmatprep.subr.mxu0 0.0
  %57 = vmatpush1.msra.mxu0 0.0
  %58 = vmatprep.subr.mxu0 0.0
  %59 = vmatpush1.msra.mxu0 0.0
  %60 = vmatprep.subr.mxu0 0.0
  %61 = vmatpush1.msra.mxu0 0.0
  %62 = vmatprep.subr.mxu0 0.0
  %63 = vmatpush1.msra.mxu0 0.0
  %64 = vmatprep.subr.mxu0 0.0
  %65 = vmatpush1.msra.mxu0 0.0
  %66 = vmatprep.subr.mxu0 0.0
  %67 = vmatpush1.msra.mxu0 0.0
  %68 = vmatprep.subr.mxu0 0.0
  %69 = vmatpush1.msra.mxu0 0.0
  %70 = vmatprep.subr.mxu0 0.0
  %71 = vmatpush1.msra.mxu0 0.0
  %72 = vmatprep.subr.mxu0 0.0
  %73 = vmatpush1.msra.mxu0 0.0
  %74 = vmatprep.subr.mxu0 0.0
  %75 = vmatpush1.msra.mxu0 0.0
  %76 = vmatprep.subr.mxu0 0.0
  %77 = vmatpush1.msra.mxu0 0.0
  %78 = vmatprep.subr.mxu0 0.0
  %79 = vmatpush1.msra.mxu0 0.0
  %80 = vmatprep.subr.mxu0 0.0
  %81 = vmatpush1.msra.mxu0 0.0
  %82 = vmatprep.subr.mxu0 0.0
  %83 = vmatpush1.msra.mxu0 0.0
  %84 = vmatprep.subr.mxu0 0.0
  %85 = vmatpush1.msra.mxu0 0.0
  %86 = vmatprep.subr.mxu0 0.0
  %87 = vmatpush1.msra.mxu0 0.0
  %88 = vmatprep.subr.mxu0 0.0
  %89 = vmatpush1.msra.mxu0 0.0
  %90 = vmatprep.subr.mxu0 0.0
  %91 = vmatpush1.msra.mxu0 0.0
  %92 = vmatprep.subr.mxu0 0.0
  %93 = vmatpush1.msra.mxu0 0.0
  %94 = vmatprep.subr.mxu0 0.0
  %95 = vmatpush1.msra.mxu0 0.0
  %96 = vmatprep.subr.mxu0 0.0
  %97 = vmatpush1.msra.mxu0 0.0
  %98 = vmatprep.subr.mxu0 0.0
  %99 = vmatpush1.msra.mxu0 0.0
  %100 = vmatprep.subr.mxu0 0.0
  %101 = vmatpush1.msra.mxu0 0.0
  %102 = vmatprep.subr.mxu0 0.0
  %103 = vmatpush1.msra.mxu0 0.0
  %104 = vmatprep.subr.mxu0 0.0
  %105 = vmatpush1.msra.mxu0 0.0
  %106 = vmatprep.mubr.f32.mxu0 0.0
  %107 = vmatmul.mubr.f32.gmra.mrb[0].mxu0 %v40
  %v108 = vpop.f32.mrb[0].mxu0
  %v109 = vadd.f32 0.0, %v108
  %v110 = vpop.f32.mrb[0].mxu0
  %111 = vdwg.mxu0
  %v112 = vld [vmem:[%s3] sm:$0x1]
  %v114 = vlaneseq
  %v115 = vshrl.u32 %v114, 7
  %v116 = vsub.s32 0, %v115
  %v117 = vrot.slane %v112, %v116
  %v119 = vmul.f32 %v109, %v117
  %v120 = vadd.f32 %v119, 0.0
  %121 = vrot.lane.b32.xlu0 %v31, 8
  %v122 = vpop.permute.xlu0 %121
  %123 = vrot.lane.b32.xlu0 %v32, 8
  %v124 = vpop.permute.xlu0 %123
  %s125 = scalar_lea.vmem %s1, 8
  %v126 = vld [vmem:[%s125] sm:$0xff]
  %v128 = vsel %vm38, %v126, 0
  %130 = vmatprep.subr.mxu0 0.0
  %131 = vmatpush1.msra.mxu0 %v122
  %132 = vmatprep.subr.mxu0 0.0
  %133 = vmatpush1.msra.mxu0 %v124
  %134 = vmatprep.subr.mxu0 0.0
  %135 = vmatpush1.msra.mxu0 0.0
  %136 = vmatprep.subr.mxu0 0.0
  %137 = vmatpush1.msra.mxu0 0.0
  %138 = vmatprep.subr.mxu0 0.0
  %139 = vmatpush1.msra.mxu0 0.0
  %140 = vmatprep.subr.mxu0 0.0
  %141 = vmatpush1.msra.mxu0 0.0
  %142 = vmatprep.subr.mxu0 0.0
  %143 = vmatpush1.msra.mxu0 0.0
  %144 = vmatprep.subr.mxu0 0.0
  %145 = vmatpush1.msra.mxu0 0.0
  %146 = vmatprep.subr.mxu0 0.0
  %147 = vmatpush1.msra.mxu0 0.0
  %148 = vmatprep.subr.mxu0 0.0
  %149 = vmatpush1.msra.mxu0 0.0
  %150 = vmatprep.subr.mxu0 0.0
  %151 = vmatpush1.msra.mxu0 0.0
  %152 = vmatprep.subr.mxu0 0.0
  %153 = vmatpush1.msra.mxu0 0.0
  %154 = vmatprep.subr.mxu0 0.0
  %155 = vmatpush1.msra.mxu0 0.0
  %156 = vmatprep.subr.mxu0 0.0
  %157 = vmatpush1.msra.mxu0 0.0
  %158 = vmatprep.subr.mxu0 0.0
  %159 = vmatpush1.msra.mxu0 0.0
  %160 = vmatprep.subr.mxu0 0.0
  %161 = vmatpush1.msra.mxu0 0.0
  %162 = vmatprep.subr.mxu0 0.0
  %163 = vmatpush1.msra.mxu0 0.0
  %164 = vmatprep.subr.mxu0 0.0
  %165 = vmatpush1.msra.mxu0 0.0
  %166 = vmatprep.subr.mxu0 0.0
  %167 = vmatpush1.msra.mxu0 0.0
  %168 = vmatprep.subr.mxu0 0.0
  %169 = vmatpush1.msra.mxu0 0.0
  %170 = vmatprep.subr.mxu0 0.0
  %171 = vmatpush1.msra.mxu0 0.0
  %172 = vmatprep.subr.mxu0 0.0
  %173 = vmatpush1.msra.mxu0 0.0
  %174 = vmatprep.subr.mxu0 0.0
  %175 = vmatpush1.msra.mxu0 0.0
  %176 = vmatprep.subr.mxu0 0.0
  %177 = vmatpush1.msra.mxu0 0.0
  %178 = vmatprep.subr.mxu0 0.0
  %179 = vmatpush1.msra.mxu0 0.0
  %180 = vmatprep.subr.mxu0 0.0
  %181 = vmatpush1.msra.mxu0 0.0
  %182 = vmatprep.subr.mxu0 0.0
  %183 = vmatpush1.msra.mxu0 0.0
  %184 = vmatprep.subr.mxu0 0.0
  %185 = vmatpush1.msra.mxu0 0.0
  %186 = vmatprep.subr.mxu0 0.0
  %187 = vmatpush1.msra.mxu0 0.0
  %188 = vmatprep.subr.mxu0 0.0
  %189 = vmatpush1.msra.mxu0 0.0
  %190 = vmatprep.subr.mxu0 0.0
  %191 = vmatpush1.msra.mxu0 0.0
  %192 = vmatprep.subr.mxu0 0.0
  %193 = vmatpush1.msra.mxu0 0.0
  %194 = vmatprep.mubr.f32.mxu0 0.0
  %195 = vmatmul.mubr.f32.gmra.mrb[0].mxu0 %v128
  %v196 = vpop.f32.mrb[0].mxu0
  %v197 = vadd.f32 0.0, %v196
  %v198 = vpop.f32.mrb[0].mxu0
  %199 = vdwg.mxu0
  %s200 = scalar_lea.vmem %s3, 1
  %v201 = vld [vmem:[%s200] sm:$0x1]
  %v203 = vlaneseq
  %v204 = vshrl.u32 %v203, 7
  %v205 = vsub.s32 0, %v204
  %v206 = vrot.slane %v201, %v205
  %v208 = vmul.f32 %v197, %v206
  %v209 = vadd.f32 %v120, %v208
  %210 = vrot.lane.b32.xlu0 %v31, 1
  %v211 = vpop.permute.xlu0 %210
  %212 = vrot.lane.b32.xlu0 %v32, 1
  %v213 = vpop.permute.xlu0 %212
  %s214 = scalar_lea.vmem %s1, 16
  %v215 = vld [vmem:[%s214] sm:$0xff]
  %v217 = vsel %vm38, %v215, 0
  %219 = vmatprep.subr.mxu0 0.0
  %220 = vmatpush1.msra.mxu0 %v211
  %221 = vmatprep.subr.mxu0 0.0
  %222 = vmatpush1.msra.mxu0 %v213
  %223 = vmatprep.subr.mxu0 0.0
  %224 = vmatpush1.msra.mxu0 0.0
  %225 = vmatprep.subr.mxu0 0.0
  %226 = vmatpush1.msra.mxu0 0.0
  %227 = vmatprep.subr.mxu0 0.0
  %228 = vmatpush1.msra.mxu0 0.0
  %229 = vmatprep.subr.mxu0 0.0
  %230 = vmatpush1.msra.mxu0 0.0
  %231 = vmatprep.subr.mxu0 0.0
  %232 = vmatpush1.msra.mxu0 0.0
  %233 = vmatprep.subr.mxu0 0.0
  %234 = vmatpush1.msra.mxu0 0.0
  %235 = vmatprep.subr.mxu0 0.0
  %236 = vmatpush1.msra.mxu0 0.0
  %237 = vmatprep.subr.mxu0 0.0
  %238 = vmatpush1.msra.mxu0 0.0
  %239 = vmatprep.subr.mxu0 0.0
  %240 = vmatpush1.msra.mxu0 0.0
  %241 = vmatprep.subr.mxu0 0.0
  %242 = vmatpush1.msra.mxu0 0.0
  %243 = vmatprep.subr.mxu0 0.0
  %244 = vmatpush1.msra.mxu0 0.0
  %245 = vmatprep.subr.mxu0 0.0
  %246 = vmatpush1.msra.mxu0 0.0
  %247 = vmatprep.subr.mxu0 0.0
  %248 = vmatpush1.msra.mxu0 0.0
  %249 = vmatprep.subr.mxu0 0.0
  %250 = vmatpush1.msra.mxu0 0.0
  %251 = vmatprep.subr.mxu0 0.0
  %252 = vmatpush1.msra.mxu0 0.0
  %253 = vmatprep.subr.mxu0 0.0
  %254 = vmatpush1.msra.mxu0 0.0
  %255 = vmatprep.subr.mxu0 0.0
  %256 = vmatpush1.msra.mxu0 0.0
  %257 = vmatprep.subr.mxu0 0.0
  %258 = vmatpush1.msra.mxu0 0.0
  %259 = vmatprep.subr.mxu0 0.0
  %260 = vmatpush1.msra.mxu0 0.0
  %261 = vmatprep.subr.mxu0 0.0
  %262 = vmatpush1.msra.mxu0 0.0
  %263 = vmatprep.subr.mxu0 0.0
  %264 = vmatpush1.msra.mxu0 0.0
  %265 = vmatprep.subr.mxu0 0.0
  %266 = vmatpush1.msra.mxu0 0.0
  %267 = vmatprep.subr.mxu0 0.0
  %268 = vmatpush1.msra.mxu0 0.0
  %269 = vmatprep.subr.mxu0 0.0
  %270 = vmatpush1.msra.mxu0 0.0
  %271 = vmatprep.subr.mxu0 0.0
  %272 = vmatpush1.msra.mxu0 0.0
  %273 = vmatprep.subr.mxu0 0.0
  %274 = vmatpush1.msra.mxu0 0.0
  %275 = vmatprep.subr.mxu0 0.0
  %276 = vmatpush1.msra.mxu0 0.0
  %277 = vmatprep.subr.mxu0 0.0
  %278 = vmatpush1.msra.mxu0 0.0
  %279 = vmatprep.subr.mxu0 0.0
  %280 = vmatpush1.msra.mxu0 0.0
  %281 = vmatprep.subr.mxu0 0.0
  %282 = vmatpush1.msra.mxu0 0.0
  %283 = vmatprep.mubr.f32.mxu0 0.0
  %284 = vmatmul.mubr.f32.gmra.mrb[0].mxu0 %v217
  %v285 = vpop.f32.mrb[0].mxu0
  %v286 = vadd.f32 0.0, %v285
  %v287 = vpop.f32.mrb[0].mxu0
  %288 = vdwg.mxu0
  %s289 = scalar_lea.vmem %s3, 2
  %v290 = vld [vmem:[%s289] sm:$0x1]
  %v292 = vlaneseq
  %v293 = vshrl.u32 %v292, 7
  %v294 = vsub.s32 0, %v293
  %v295 = vrot.slane %v290, %v294
  %v297 = vmul.f32 %v286, %v295
  %v298 = vadd.f32 %v209, %v297
  %s299 = scalar_lea.vmem %s1, 24
  %v300 = vld [vmem:[%s299] sm:$0xff]
  %v302 = vsel %vm38, %v300, 0
  %304 = vmatprep.subr.mxu0 0.0
  %305 = vmatpush1.msra.mxu0 %v31
  %306 = vmatprep.subr.mxu0 0.0
  %307 = vmatpush1.msra.mxu0 %v32
  %308 = vmatprep.subr.mxu0 0.0
  %309 = vmatpush1.msra.mxu0 0.0
  %310 = vmatprep.subr.mxu0 0.0
  %311 = vmatpush1.msra.mxu0 0.0
  %312 = vmatprep.subr.mxu0 0.0
  %313 = vmatpush1.msra.mxu0 0.0
  %314 = vmatprep.subr.mxu0 0.0
  %315 = vmatpush1.msra.mxu0 0.0
  %316 = vmatprep.subr.mxu0 0.0
  %317 = vmatpush1.msra.mxu0 0.0
  %318 = vmatprep.subr.mxu0 0.0
  %319 = vmatpush1.msra.mxu0 0.0
  %320 = vmatprep.subr.mxu0 0.0
  %321 = vmatpush1.msra.mxu0 0.0
  %322 = vmatprep.subr.mxu0 0.0
  %323 = vmatpush1.msra.mxu0 0.0
  %324 = vmatprep.subr.mxu0 0.0
  %325 = vmatpush1.msra.mxu0 0.0
  %326 = vmatprep.subr.mxu0 0.0
  %327 = vmatpush1.msra.mxu0 0.0
  %328 = vmatprep.subr.mxu0 0.0
  %329 = vmatpush1.msra.mxu0 0.0
  %330 = vmatprep.subr.mxu0 0.0
  %331 = vmatpush1.msra.mxu0 0.0
  %332 = vmatprep.subr.mxu0 0.0
  %333 = vmatpush1.msra.mxu0 0.0
  %334 = vmatprep.subr.mxu0 0.0
  %335 = vmatpush1.msra.mxu0 0.0
  %336 = vmatprep.subr.mxu0 0.0
  %337 = vmatpush1.msra.mxu0 0.0
  %338 = vmatprep.subr.mxu0 0.0
  %339 = vmatpush1.msra.mxu0 0.0
  %340 = vmatprep.subr.mxu0 0.0
  %341 = vmatpush1.msra.mxu0 0.0
  %342 = vmatprep.subr.mxu0 0.0
  %343 = vmatpush1.msra.mxu0 0.0
  %344 = vmatprep.subr.mxu0 0.0
  %345 = vmatpush1.msra.mxu0 0.0
  %346 = vmatprep.subr.mxu0 0.0
  %347 = vmatpush1.msra.mxu0 0.0
  %348 = vmatprep.subr.mxu0 0.0
  %349 = vmatpush1.msra.mxu0 0.0
  %350 = vmatprep.subr.mxu0 0.0
  %351 = vmatpush1.msra.mxu0 0.0
  %352 = vmatprep.subr.mxu0 0.0
  %353 = vmatpush1.msra.mxu0 0.0
  %354 = vmatprep.subr.mxu0 0.0
  %355 = vmatpush1.msra.mxu0 0.0
  %356 = vmatprep.subr.mxu0 0.0
  %357 = vmatpush1.msra.mxu0 0.0
  %358 = vmatprep.subr.mxu0 0.0
  %359 = vmatpush1.msra.mxu0 0.0
  %360 = vmatprep.subr.mxu0 0.0
  %361 = vmatpush1.msra.mxu0 0.0
  %362 = vmatprep.subr.mxu0 0.0
  %363 = vmatpush1.msra.mxu0 0.0
  %364 = vmatprep.subr.mxu0 0.0
  %365 = vmatpush1.msra.mxu0 0.0
  %366 = vmatprep.subr.mxu0 0.0
  %367 = vmatpush1.msra.mxu0 0.0
  %368 = vmatprep.mubr.f32.mxu0 0.0
  %369 = vmatmul.mubr.f32.gmra.mrb[0].mxu0 %v302
  %v370 = vpop.f32.mrb[0].mxu0
  %v371 = vadd.f32 0.0, %v370
  %v372 = vpop.f32.mrb[0].mxu0
  %373 = vdwg.mxu0
  %v374 = vadd.f32 %v298, %v371
  %v375 = vld [vmem:[%s2] sm:$0xff]
  %377 = vset.pattern.permute.xlu0 0
  %378 = vperm.xlu0 %377, %v375
  %v379 = vpop.permute.xlu0 %378
  %v381 = vadd.f32 %v374, %v379
  %v382 = vpack.c.bf16 %v381, %v381
  %383 = vst [vmem:[%s6] sm:$0xf] %v382
  %384 = vadd.xlane.f32.xlu0 %v381
  %v385 = vpop.xlane.xlu0 %384
  %vm386 = vcmask 7168
  %387 = vst.msk [vmem:[%s7] sm:$0xff] %vm386, %v385
  %v388 = vmul.f32 %v381, %v381
  %389 = vadd.xlane.f32.xlu0 %v388
  %v390 = vpop.xlane.xlu0 %389
  %391 = vst.msk [vmem:[%s8] sm:$0xff] %vm386, %v390
  %v392 = vld [vmem:[%s4] sm:$0xff]
  %v393 = vld [vmem:[%s5] sm:$0xff]
  %395 = vset.pattern.permute.xlu0 0
  %396 = vperm.xlu0 %395, %v393
  %v397 = vpop.permute.xlu0 %396
  %v400 = vsel %vm38, %v392, 0
  %402 = vmatprep.subr.mxu0 0.0
  %403 = vmatpush1.msra.mxu0 %v31
  %404 = vmatprep.subr.mxu0 0.0
  %405 = vmatpush1.msra.mxu0 %v32
  %406 = vmatprep.subr.mxu0 0.0
  %407 = vmatpush1.msra.mxu0 0.0
  %408 = vmatprep.subr.mxu0 0.0
  %409 = vmatpush1.msra.mxu0 0.0
  %410 = vmatprep.subr.mxu0 0.0
  %411 = vmatpush1.msra.mxu0 0.0
  %412 = vmatprep.subr.mxu0 0.0
  %413 = vmatpush1.msra.mxu0 0.0
  %414 = vmatprep.subr.mxu0 0.0
  %415 = vmatpush1.msra.mxu0 0.0
  %416 = vmatprep.subr.mxu0 0.0
  %417 = vmatpush1.msra.mxu0 0.0
  %418 = vmatprep.subr.mxu0 0.0
  %419 = vmatpush1.msra.mxu0 0.0
  %420 = vmatprep.subr.mxu0 0.0
  %421 = vmatpush1.msra.mxu0 0.0
  %422 = vmatprep.subr.mxu0 0.0
  %423 = vmatpush1.msra.mxu0 0.0
  %424 = vmatprep.subr.mxu0 0.0
  %425 = vmatpush1.msra.mxu0 0.0
  %426 = vmatprep.subr.mxu0 0.0
  %427 = vmatpush1.msra.mxu0 0.0
  %428 = vmatprep.subr.mxu0 0.0
  %429 = vmatpush1.msra.mxu0 0.0
  %430 = vmatprep.subr.mxu0 0.0
  %431 = vmatpush1.msra.mxu0 0.0
  %432 = vmatprep.subr.mxu0 0.0
  %433 = vmatpush1.msra.mxu0 0.0
  %434 = vmatprep.subr.mxu0 0.0
  %435 = vmatpush1.msra.mxu0 0.0
  %436 = vmatprep.subr.mxu0 0.0
  %437 = vmatpush1.msra.mxu0 0.0
  %438 = vmatprep.subr.mxu0 0.0
  %439 = vmatpush1.msra.mxu0 0.0
  %440 = vmatprep.subr.mxu0 0.0
  %441 = vmatpush1.msra.mxu0 0.0
  %442 = vmatprep.subr.mxu0 0.0
  %443 = vmatpush1.msra.mxu0 0.0
  %444 = vmatprep.subr.mxu0 0.0
  %445 = vmatpush1.msra.mxu0 0.0
  %446 = vmatprep.subr.mxu0 0.0
  %447 = vmatpush1.msra.mxu0 0.0
  %448 = vmatprep.subr.mxu0 0.0
  %449 = vmatpush1.msra.mxu0 0.0
  %450 = vmatprep.subr.mxu0 0.0
  %451 = vmatpush1.msra.mxu0 0.0
  %452 = vmatprep.subr.mxu0 0.0
  %453 = vmatpush1.msra.mxu0 0.0
  %454 = vmatprep.subr.mxu0 0.0
  %455 = vmatpush1.msra.mxu0 0.0
  %456 = vmatprep.subr.mxu0 0.0
  %457 = vmatpush1.msra.mxu0 0.0
  %458 = vmatprep.subr.mxu0 0.0
  %459 = vmatpush1.msra.mxu0 0.0
  %460 = vmatprep.subr.mxu0 0.0
  %461 = vmatpush1.msra.mxu0 0.0
  %462 = vmatprep.subr.mxu0 0.0
  %463 = vmatpush1.msra.mxu0 0.0
  %464 = vmatprep.subr.mxu0 0.0
  %465 = vmatpush1.msra.mxu0 0.0
  %466 = vmatprep.mubr.f32.mxu0 0.0
  %467 = vmatmul.mubr.f32.gmra.mrb[0].mxu0 %v400
  %v468 = vpop.f32.mrb[0].mxu0
  %v469 = vadd.f32 %v397, %v468
  %v470 = vpop.f32.mrb[0].mxu0
  %471 = vdwg.mxu0
  %v472 = vpack.c.bf16 %v469, %v469
  %473 = vst [vmem:[%s9] sm:$0xf] %v472
  %474 = vadd.xlane.f32.xlu0 %v469
  %v475 = vpop.xlane.xlu0 %474
  %476 = vst.msk [vmem:[%s10] sm:$0xff] %vm386, %v475
  %v477 = vmul.f32 %v469, %v469
  %478 = vadd.xlane.f32.xlu0 %v477
  %v479 = vpop.xlane.xlu0 %478
  %480 = vst.msk [vmem:[%s11] sm:$0xff] %vm386, %v479
  // Predicated region
  $region26: #{event_encoder_forward.3} parent=0 // pred_check
    _
  $region27: #{event_encoder_forward.3} parent=0 // pred_check_branch
    %482 = sbr.rel (0) target = $region29
  $region28: #{event_encoder_forward.3} parent=0 // pred_region
    _
  $region29: #{event_encoder_forward.3} parent=0 // pred_fallthru
    _
  // Predicated region
  $region30: #{event_encoder_forward.3} parent=0 // pred_check
    _
  $region31: #{event_encoder_forward.3} parent=0 // pred_check_branch
    %484 = sbr.rel (0) target = $region33
  $region32: #{event_encoder_forward.3} parent=0 // pred_region
    _
  $region33: #{event_encoder_forward.3} parent=0 // pred_fallthru
    _
  // Predicated region
  $region34: #{event_encoder_forward.3} parent=0 // pred_check
    _
  $region35: #{event_encoder_forward.3} parent=0 // pred_check_branch
    %486 = sbr.rel (0) target = $region37
  $region36: #{event_encoder_forward.3} parent=0 // pred_region
    _
  $region37: #{event_encoder_forward.3} parent=0 // pred_fallthru
    _
  // Predicated region
  $region38: #{event_encoder_forward.3} parent=0 // pred_check
    _
  $region39: #{event_encoder_forward.3} parent=0 // pred_check_branch
    %488 = sbr.rel (0) target = $region41
  $region40: #{event_encoder_forward.3} parent=0 // pred_region
    _
  $region41: #{event_encoder_forward.3} parent=0 // pred_fallthru
    _
  // Predicated region
  $region42: #{event_encoder_forward.3} parent=0 // pred_check
    _
  $region43: #{event_encoder_forward.3} parent=0 // pred_check_branch
    %490 = sbr.rel (0) target = $region45
  $region44: #{event_encoder_forward.3} parent=0 // pred_region
    _
  $region45: #{event_encoder_forward.3} parent=0 // pred_fallthru
    _
  // Predicated region
  $region46: #{event_encoder_forward.3} parent=0 // pred_check
    _
  $region47: #{event_encoder_forward.3} parent=0 // pred_check_branch
    %492 = sbr.rel (0) target = $region49
  $region48: #{event_encoder_forward.3} parent=0 // pred_region
    _
  $region49: #{event_encoder_forward.3} parent=0 // pred_fallthru
    _
  // Predicated region
  $region50: #{event_encoder_forward.3} parent=0 // pred_check
    _
  $region51: #{event_encoder_forward.3} parent=0 // pred_check_branch
    %494 = sbr.rel (0) target = $region53
  $region52: #{event_encoder_forward.3} parent=0 // pred_region
    _
  $region53: #{event_encoder_forward.3} parent=0 // pred_fallthru
    _
  // Predicated region
  $region54: #{event_encoder_forward.3} parent=0 // pred_check
    _
  $region55: #{event_encoder_forward.3} parent=0 // pred_check_branch
    %496 = sbr.rel (0) target = $region57
  $region56: #{event_encoder_forward.3} parent=0 // pred_region
    _
  $region57: #{event_encoder_forward.3} parent=0 // pred_fallthru
    _
  // Predicated region
  $region58: #{event_encoder_forward.3} parent=0 // pred_check
    _
  $region59: #{event_encoder_forward.3} parent=0 // pred_check_branch
    %498 = sbr.rel (0) target = $region61
  $region60: #{event_encoder_forward.3} parent=0 // pred_region
    _
  $region61: #{event_encoder_forward.3} parent=0 // pred_fallthru
    _
  // Predicated region
  $region62: #{event_encoder_forward.3} parent=0 // pred_check
    _
  $region63: #{event_encoder_forward.3} parent=0 // pred_check_branch
    %500 = sbr.rel (0) target = $region65
  $region64: #{event_encoder_forward.3} parent=0 // pred_region
    _
  $region65: #{event_encoder_forward.3} parent=0 // pred_fallthru
    _
  // Predicated region
  $region66: #{event_encoder_forward.3} parent=0 // pred_check
    _
  $region67: #{event_encoder_forward.3} parent=0 // pred_check_branch
    %502 = sbr.rel (0) target = $region69
  $region68: #{event_encoder_forward.3} parent=0 // pred_region
    _
  $region69: #{event_encoder_forward.3} parent=0 // pred_fallthru
    _
  // Predicated region
  $region70: #{event_encoder_forward.3} parent=0 // pred_check
    _
  $region71: #{event_encoder_forward.3} parent=0 // pred_check_branch
    %504 = sbr.rel (0) target = $region73
  $region72: #{event_encoder_forward.3} parent=0 // pred_region
    _
  $region73: #{event_encoder_forward.3} parent=0 // pred_fallthru
    _

// kernel: event_encoder_forward.4
$region0: #{event_encoder_forward.4}
  #allocation0 [shape = 'u32[]', space=smem, size = 0x4, offset = 0x4, fixed_abs, tag = 'smem constant byte address 0x4 - core index']
  #allocation1 [shape = 'u32[144,128]{1,0:T(1,128)}', space=vmem, size = 0x12000, scoped, tag = 'internal scratch']
  #allocation2 [shape = 'f32[1]{0:T(128)S(6)}', space=smem, size = 0x200, scoped, tag = 'scoped memory for event_encoder_forward.4']
  %s0 = inlined_call_operand.vmem [shape: bf16[8,128], index: 0, kind: input, shape index: {}]
  %s1 = inlined_call_operand.vmem [shape: f32[9,8,8], index: 1, kind: input, shape index: {}]
  %s2 = inlined_call_operand.vmem [shape: f32[8,1], index: 2, kind: input, shape index: {}]
  %s3 = inlined_call_operand.vmem [shape: f32[9,1,128], index: 3, kind: input, shape index: {}]
  %s4 = inlined_call_operand.vmem [shape: f32[8,1], index: 4, kind: input, shape index: {}]
  %s5 = inlined_call_operand.vmem [shape: f32[8,1], index: 5, kind: input, shape index: {}]
  %s6 = inlined_call_operand.<no memory space> [shape: f32[1], index: 6, kind: input, shape index: {}]
  %s7 = inlined_call_operand.vmem [shape: bf16[8,128], index: 7, kind: output, shape index: {0}]
  %s8 = inlined_call_operand.vmem [shape: f32[1,8,1], index: 8, kind: output, shape index: {1}]
  %s9 = inlined_call_operand.vmem [shape: f32[1,8,1], index: 9, kind: output, shape index: {2}]
  %10 = xla_tuple %s7, %s8, %s9
  %s11 = sld [smem:[#allocation0]]
  $region54: #{event_encoder_forward.4} parent=0
    _
  %s13 = ssub.s32 1, %s11
  %s14 = scalar_select 0, %s13, %s11
  %15 = sst [smem:[#allocation2]] %s6
  // Predicated region
  $region2: #{event_encoder_forward.4} parent=0 // pred_check
    _
  $region3: #{event_encoder_forward.4} parent=0 // pred_check_branch
    %17 = sbr.rel (0) target = $region5
  $region4: #{event_encoder_forward.4} parent=0 // pred_region
    _
  $region5: #{event_encoder_forward.4} parent=0 // pred_fallthru
    _
  // Predicated region
  $region6: #{event_encoder_forward.4} parent=0 // pred_check
    _
  $region7: #{event_encoder_forward.4} parent=0 // pred_check_branch
    %19 = sbr.rel (0) target = $region9
  $region8: #{event_encoder_forward.4} parent=0 // pred_region
    _
  $region9: #{event_encoder_forward.4} parent=0 // pred_fallthru
    _
  // Predicated region
  $region10: #{event_encoder_forward.4} parent=0 // pred_check
    _
  $region11: #{event_encoder_forward.4} parent=0 // pred_check_branch
    %21 = sbr.rel (0) target = $region13
  $region12: #{event_encoder_forward.4} parent=0 // pred_region
    _
  $region13: #{event_encoder_forward.4} parent=0 // pred_fallthru
    _
  // Predicated region
  $region14: #{event_encoder_forward.4} parent=0 // pred_check
    _
  $region15: #{event_encoder_forward.4} parent=0 // pred_check_branch
    %23 = sbr.rel (0) target = $region17
  $region16: #{event_encoder_forward.4} parent=0 // pred_region
    _
  $region17: #{event_encoder_forward.4} parent=0 // pred_fallthru
    _
  // Predicated region
  $region18: #{event_encoder_forward.4} parent=0 // pred_check
    _
  $region19: #{event_encoder_forward.4} parent=0 // pred_check_branch
    %25 = sbr.rel (0) target = $region21
  $region20: #{event_encoder_forward.4} parent=0 // pred_region
    _
  $region21: #{event_encoder_forward.4} parent=0 // pred_fallthru
    _
  // Predicated region
  $region22: #{event_encoder_forward.4} parent=0 // pred_check
    _
  $region23: #{event_encoder_forward.4} parent=0 // pred_check_branch
    %27 = sbr.rel (0) target = $region25
  $region24: #{event_encoder_forward.4} parent=0 // pred_region
    _
  $region25: #{event_encoder_forward.4} parent=0 // pred_fallthru
    _
  // Predicated region
  $region26: #{event_encoder_forward.4} parent=0 // pred_check
    _
  $region27: #{event_encoder_forward.4} parent=0 // pred_check_branch
    %29 = sbr.rel (0) target = $region29
  $region28: #{event_encoder_forward.4} parent=0 // pred_region
    _
  $region29: #{event_encoder_forward.4} parent=0 // pred_fallthru
    _
  %v30 = vld [vmem:[%s0] sm:$0xf]
  %v31 = vunpack.c.l.bf16 %v30
  %v32 = vld [vmem:[%s4] sm:$0xff]
  %34 = vset.pattern.permute.xlu0 0
  %35 = vperm.xlu0 %34, %v32
  %v36 = vpop.permute.xlu0 %35
  %v38 = vmul.f32 %v31, %v36
  %v39 = vld [vmem:[%s5] sm:$0xff]
  %41 = vset.pattern.permute.xlu0 0
  %42 = vperm.xlu0 %41, %v39
  %v43 = vpop.permute.xlu0 %42
  %v45 = vadd.f32 %v38, %v43
  %s46 = sld [smem:[#allocation2]]
  %vm47 = vcmp.ge.f32.partialorder %v45, 0.0
  %v48 = vstv %s46
  %v49 = vmul.f32 %v48, %v45
  %v50 = vsel %vm47, %v45, %v49
  %51 = vrot.lane.b32.xlu0 %v50, 9
  %v52 = vpop.permute.xlu0 %51
  %v53 = vld [vmem:[%s1] sm:$0xff]
  %vm54 = vcmask 64512
  %v56 = vsel %vm54, %v53, 0
  %58 = vmatprep.subr.mxu0 0.0
  %59 = vmatpush1.msra.mxu0 %v52
  %60 = vmatprep.subr.mxu0 0.0
  %61 = vmatpush1.msra.mxu0 0.0
  %62 = vmatprep.subr.mxu0 0.0
  %63 = vmatpush1.msra.mxu0 0.0
  %64 = vmatprep.subr.mxu0 0.0
  %65 = vmatpush1.msra.mxu0 0.0
  %66 = vmatprep.subr.mxu0 0.0
  %67 = vmatpush1.msra.mxu0 0.0
  %68 = vmatprep.subr.mxu0 0.0
  %69 = vmatpush1.msra.mxu0 0.0
  %70 = vmatprep.subr.mxu0 0.0
  %71 = vmatpush1.msra.mxu0 0.0
  %72 = vmatprep.subr.mxu0 0.0
  %73 = vmatpush1.msra.mxu0 0.0
  %74 = vmatprep.subr.mxu0 0.0
  %75 = vmatpush1.msra.mxu0 0.0
  %76 = vmatprep.subr.mxu0 0.0
  %77 = vmatpush1.msra.mxu0 0.0
  %78 = vmatprep.subr.mxu0 0.0
  %79 = vmatpush1.msra.mxu0 0.0
  %80 = vmatprep.subr.mxu0 0.0
  %81 = vmatpush1.msra.mxu0 0.0
  %82 = vmatprep.subr.mxu0 0.0
  %83 = vmatpush1.msra.mxu0 0.0
  %84 = vmatprep.subr.mxu0 0.0
  %85 = vmatpush1.msra.mxu0 0.0
  %86 = vmatprep.subr.mxu0 0.0
  %87 = vmatpush1.msra.mxu0 0.0
  %88 = vmatprep.subr.mxu0 0.0
  %89 = vmatpush1.msra.mxu0 0.0
  %90 = vmatprep.subr.mxu0 0.0
  %91 = vmatpush1.msra.mxu0 0.0
  %92 = vmatprep.subr.mxu0 0.0
  %93 = vmatpush1.msra.mxu0 0.0
  %94 = vmatprep.subr.mxu0 0.0
  %95 = vmatpush1.msra.mxu0 0.0
  %96 = vmatprep.subr.mxu0 0.0
  %97 = vmatpush1.msra.mxu0 0.0
  %98 = vmatprep.subr.mxu0 0.0
  %99 = vmatpush1.msra.mxu0 0.0
  %100 = vmatprep.subr.mxu0 0.0
  %101 = vmatpush1.msra.mxu0 0.0
  %102 = vmatprep.subr.mxu0 0.0
  %103 = vmatpush1.msra.mxu0 0.0
  %104 = vmatprep.subr.mxu0 0.0
  %105 = vmatpush1.msra.mxu0 0.0
  %106 = vmatprep.subr.mxu0 0.0
  %107 = vmatpush1.msra.mxu0 0.0
  %108 = vmatprep.subr.mxu0 0.0
  %109 = vmatpush1.msra.mxu0 0.0
  %110 = vmatprep.subr.mxu0 0.0
  %111 = vmatpush1.msra.mxu0 0.0
  %112 = vmatprep.subr.mxu0 0.0
  %113 = vmatpush1.msra.mxu0 0.0
  %114 = vmatprep.subr.mxu0 0.0
  %115 = vmatpush1.msra.mxu0 0.0
  %116 = vmatprep.subr.mxu0 0.0
  %117 = vmatpush1.msra.mxu0 0.0
  %118 = vmatprep.subr.mxu0 0.0
  %119 = vmatpush1.msra.mxu0 0.0
  %120 = vmatprep.subr.mxu0 0.0
  %121 = vmatpush1.msra.mxu0 0.0
  %122 = vmatprep.mubr.f32.mxu0 0.0
  %123 = vmatmul.mubr.f32.gmra.mrb[0].mxu0 %v56
  %v124 = vpop.f32.mrb[0].mxu0
  %v125 = vadd.f32 0.0, %v124
  %v126 = vpop.f32.mrb[0].mxu0
  %127 = vdwg.mxu0
  %v128 = vld [vmem:[%s3] sm:$0x1]
  %v130 = vlaneseq
  %v131 = vshrl.u32 %v130, 7
  %v132 = vsub.s32 0, %v131
  %v133 = vrot.slane %v128, %v132
  %v135 = vmul.f32 %v125, %v133
  %v136 = vadd.f32 %v135, 0.0
  %137 = vrot.lane.b32.xlu0 %v50, 8
  %v138 = vpop.permute.xlu0 %137
  %s139 = scalar_lea.vmem %s1, 8
  %v140 = vld [vmem:[%s139] sm:$0xff]
  %v142 = vsel %vm54, %v140, 0
  %144 = vmatprep.subr.mxu0 0.0
  %145 = vmatpush1.msra.mxu0 %v138
  %146 = vmatprep.subr.mxu0 0.0
  %147 = vmatpush1.msra.mxu0 0.0
  %148 = vmatprep.subr.mxu0 0.0
  %149 = vmatpush1.msra.mxu0 0.0
  %150 = vmatprep.subr.mxu0 0.0
  %151 = vmatpush1.msra.mxu0 0.0
  %152 = vmatprep.subr.mxu0 0.0
  %153 = vmatpush1.msra.mxu0 0.0
  %154 = vmatprep.subr.mxu0 0.0
  %155 = vmatpush1.msra.mxu0 0.0
  %156 = vmatprep.subr.mxu0 0.0
  %157 = vmatpush1.msra.mxu0 0.0
  %158 = vmatprep.subr.mxu0 0.0
  %159 = vmatpush1.msra.mxu0 0.0
  %160 = vmatprep.subr.mxu0 0.0
  %161 = vmatpush1.msra.mxu0 0.0
  %162 = vmatprep.subr.mxu0 0.0
  %163 = vmatpush1.msra.mxu0 0.0
  %164 = vmatprep.subr.mxu0 0.0
  %165 = vmatpush1.msra.mxu0 0.0
  %166 = vmatprep.subr.mxu0 0.0
  %167 = vmatpush1.msra.mxu0 0.0
  %168 = vmatprep.subr.mxu0 0.0
  %169 = vmatpush1.msra.mxu0 0.0
  %170 = vmatprep.subr.mxu0 0.0
  %171 = vmatpush1.msra.mxu0 0.0
  %172 = vmatprep.subr.mxu0 0.0
  %173 = vmatpush1.msra.mxu0 0.0
  %174 = vmatprep.subr.mxu0 0.0
  %175 = vmatpush1.msra.mxu0 0.0
  %176 = vmatprep.subr.mxu0 0.0
  %177 = vmatpush1.msra.mxu0 0.0
  %178 = vmatprep.subr.mxu0 0.0
  %179 = vmatpush1.msra.mxu0 0.0
  %180 = vmatprep.subr.mxu0 0.0
  %181 = vmatpush1.msra.mxu0 0.0
  %182 = vmatprep.subr.mxu0 0.0
  %183 = vmatpush1.msra.mxu0 0.0
  %184 = vmatprep.subr.mxu0 0.0
  %185 = vmatpush1.msra.mxu0 0.0
  %186 = vmatprep.subr.mxu0 0.0
  %187 = vmatpush1.msra.mxu0 0.0
  %188 = vmatprep.subr.mxu0 0.0
  %189 = vmatpush1.msra.mxu0 0.0
  %190 = vmatprep.subr.mxu0 0.0
  %191 = vmatpush1.msra.mxu0 0.0
  %192 = vmatprep.subr.mxu0 0.0
  %193 = vmatpush1.msra.mxu0 0.0
  %194 = vmatprep.subr.mxu0 0.0
  %195 = vmatpush1.msra.mxu0 0.0
  %196 = vmatprep.subr.mxu0 0.0
  %197 = vmatpush1.msra.mxu0 0.0
  %198 = vmatprep.subr.mxu0 0.0
  %199 = vmatpush1.msra.mxu0 0.0
  %200 = vmatprep.subr.mxu0 0.0
  %201 = vmatpush1.msra.mxu0 0.0
  %202 = vmatprep.subr.mxu0 0.0
  %203 = vmatpush1.msra.mxu0 0.0
  %204 = vmatprep.subr.mxu0 0.0
  %205 = vmatpush1.msra.mxu0 0.0
  %206 = vmatprep.subr.mxu0 0.0
  %207 = vmatpush1.msra.mxu0 0.0
  %208 = vmatprep.mubr.f32.mxu0 0.0
  %209 = vmatmul.mubr.f32.gmra.mrb[0].mxu0 %v142
  %v210 = vpop.f32.mrb[0].mxu0
  %v211 = vadd.f32 0.0, %v210
  %v212 = vpop.f32.mrb[0].mxu0
  %213 = vdwg.mxu0
  %s214 = scalar_lea.vmem %s3, 1
  %v215 = vld [vmem:[%s214] sm:$0x1]
  %v217 = vlaneseq
  %v218 = vshrl.u32 %v217, 7
  %v219 = vsub.s32 0, %v218
  %v220 = vrot.slane %v215, %v219
  %v222 = vmul.f32 %v211, %v220
  %v223 = vadd.f32 %v136, %v222
  %224 = vrot.lane.b32.xlu0 %v50, 7
  %v225 = vpop.permute.xlu0 %224
  %s226 = scalar_lea.vmem %s1, 16
  %v227 = vld [vmem:[%s226] sm:$0xff]
  %v229 = vsel %vm54, %v227, 0
  %231 = vmatprep.subr.mxu0 0.0
  %232 = vmatpush1.msra.mxu0 %v225
  %233 = vmatprep.subr.mxu0 0.0
  %234 = vmatpush1.msra.mxu0 0.0
  %235 = vmatprep.subr.mxu0 0.0
  %236 = vmatpush1.msra.mxu0 0.0
  %237 = vmatprep.subr.mxu0 0.0
  %238 = vmatpush1.msra.mxu0 0.0
  %239 = vmatprep.subr.mxu0 0.0
  %240 = vmatpush1.msra.mxu0 0.0
  %241 = vmatprep.subr.mxu0 0.0
  %242 = vmatpush1.msra.mxu0 0.0
  %243 = vmatprep.subr.mxu0 0.0
  %244 = vmatpush1.msra.mxu0 0.0
  %245 = vmatprep.subr.mxu0 0.0
  %246 = vmatpush1.msra.mxu0 0.0
  %247 = vmatprep.subr.mxu0 0.0
  %248 = vmatpush1.msra.mxu0 0.0
  %249 = vmatprep.subr.mxu0 0.0
  %250 = vmatpush1.msra.mxu0 0.0
  %251 = vmatprep.subr.mxu0 0.0
  %252 = vmatpush1.msra.mxu0 0.0
  %253 = vmatprep.subr.mxu0 0.0
  %254 = vmatpush1.msra.mxu0 0.0
  %255 = vmatprep.subr.mxu0 0.0
  %256 = vmatpush1.msra.mxu0 0.0
  %257 = vmatprep.subr.mxu0 0.0
  %258 = vmatpush1.msra.mxu0 0.0
  %259 = vmatprep.subr.mxu0 0.0
  %260 = vmatpush1.msra.mxu0 0.0
  %261 = vmatprep.subr.mxu0 0.0
  %262 = vmatpush1.msra.mxu0 0.0
  %263 = vmatprep.subr.mxu0 0.0
  %264 = vmatpush1.msra.mxu0 0.0
  %265 = vmatprep.subr.mxu0 0.0
  %266 = vmatpush1.msra.mxu0 0.0
  %267 = vmatprep.subr.mxu0 0.0
  %268 = vmatpush1.msra.mxu0 0.0
  %269 = vmatprep.subr.mxu0 0.0
  %270 = vmatpush1.msra.mxu0 0.0
  %271 = vmatprep.subr.mxu0 0.0
  %272 = vmatpush1.msra.mxu0 0.0
  %273 = vmatprep.subr.mxu0 0.0
  %274 = vmatpush1.msra.mxu0 0.0
  %275 = vmatprep.subr.mxu0 0.0
  %276 = vmatpush1.msra.mxu0 0.0
  %277 = vmatprep.subr.mxu0 0.0
  %278 = vmatpush1.msra.mxu0 0.0
  %279 = vmatprep.subr.mxu0 0.0
  %280 = vmatpush1.msra.mxu0 0.0
  %281 = vmatprep.subr.mxu0 0.0
  %282 = vmatpush1.msra.mxu0 0.0
  %283 = vmatprep.subr.mxu0 0.0
  %284 = vmatpush1.msra.mxu0 0.0
  %285 = vmatprep.subr.mxu0 0.0
  %286 = vmatpush1.msra.mxu0 0.0
  %287 = vmatprep.subr.mxu0 0.0
  %288 = vmatpush1.msra.mxu0 0.0
  %289 = vmatprep.subr.mxu0 0.0
  %290 = vmatpush1.msra.mxu0 0.0
  %291 = vmatprep.subr.mxu0 0.0
  %292 = vmatpush1.msra.mxu0 0.0
  %293 = vmatprep.subr.mxu0 0.0
  %294 = vmatpush1.msra.mxu0 0.0
  %295 = vmatprep.mubr.f32.mxu0 0.0
  %296 = vmatmul.mubr.f32.gmra.mrb[0].mxu0 %v229
  %v297 = vpop.f32.mrb[0].mxu0
  %v298 = vadd.f32 0.0, %v297
  %v299 = vpop.f32.mrb[0].mxu0
  %300 = vdwg.mxu0
  %s301 = scalar_lea.vmem %s3, 2
  %v302 = vld [vmem:[%s301] sm:$0x1]
  %v304 = vlaneseq
  %v305 = vshrl.u32 %v304, 7
  %v306 = vsub.s32 0, %v305
  %v307 = vrot.slane %v302, %v306
  %v309 = vmul.f32 %v298, %v307
  %v310 = vadd.f32 %v223, %v309
  %311 = vrot.lane.b32.xlu0 %v50, 1
  %v312 = vpop.permute.xlu0 %311
  %s313 = scalar_lea.vmem %s1, 24
  %v314 = vld [vmem:[%s313] sm:$0xff]
  %v316 = vsel %vm54, %v314, 0
  %318 = vmatprep.subr.mxu0 0.0
  %319 = vmatpush1.msra.mxu0 %v312
  %320 = vmatprep.subr.mxu0 0.0
  %321 = vmatpush1.msra.mxu0 0.0
  %322 = vmatprep.subr.mxu0 0.0
  %323 = vmatpush1.msra.mxu0 0.0
  %324 = vmatprep.subr.mxu0 0.0
  %325 = vmatpush1.msra.mxu0 0.0
  %326 = vmatprep.subr.mxu0 0.0
  %327 = vmatpush1.msra.mxu0 0.0
  %328 = vmatprep.subr.mxu0 0.0
  %329 = vmatpush1.msra.mxu0 0.0
  %330 = vmatprep.subr.mxu0 0.0
  %331 = vmatpush1.msra.mxu0 0.0
  %332 = vmatprep.subr.mxu0 0.0
  %333 = vmatpush1.msra.mxu0 0.0
  %334 = vmatprep.subr.mxu0 0.0
  %335 = vmatpush1.msra.mxu0 0.0
  %336 = vmatprep.subr.mxu0 0.0
  %337 = vmatpush1.msra.mxu0 0.0
  %338 = vmatprep.subr.mxu0 0.0
  %339 = vmatpush1.msra.mxu0 0.0
  %340 = vmatprep.subr.mxu0 0.0
  %341 = vmatpush1.msra.mxu0 0.0
  %342 = vmatprep.subr.mxu0 0.0
  %343 = vmatpush1.msra.mxu0 0.0
  %344 = vmatprep.subr.mxu0 0.0
  %345 = vmatpush1.msra.mxu0 0.0
  %346 = vmatprep.subr.mxu0 0.0
  %347 = vmatpush1.msra.mxu0 0.0
  %348 = vmatprep.subr.mxu0 0.0
  %349 = vmatpush1.msra.mxu0 0.0
  %350 = vmatprep.subr.mxu0 0.0
  %351 = vmatpush1.msra.mxu0 0.0
  %352 = vmatprep.subr.mxu0 0.0
  %353 = vmatpush1.msra.mxu0 0.0
  %354 = vmatprep.subr.mxu0 0.0
  %355 = vmatpush1.msra.mxu0 0.0
  %356 = vmatprep.subr.mxu0 0.0
  %357 = vmatpush1.msra.mxu0 0.0
  %358 = vmatprep.subr.mxu0 0.0
  %359 = vmatpush1.msra.mxu0 0.0
  %360 = vmatprep.subr.mxu0 0.0
  %361 = vmatpush1.msra.mxu0 0.0
  %362 = vmatprep.subr.mxu0 0.0
  %363 = vmatpush1.msra.mxu0 0.0
  %364 = vmatprep.subr.mxu0 0.0
  %365 = vmatpush1.msra.mxu0 0.0
  %366 = vmatprep.subr.mxu0 0.0
  %367 = vmatpush1.msra.mxu0 0.0
  %368 = vmatprep.subr.mxu0 0.0
  %369 = vmatpush1.msra.mxu0 0.0
  %370 = vmatprep.subr.mxu0 0.0
  %371 = vmatpush1.msra.mxu0 0.0
  %372 = vmatprep.subr.mxu0 0.0
  %373 = vmatpush1.msra.mxu0 0.0
  %374 = vmatprep.subr.mxu0 0.0
  %375 = vmatpush1.msra.mxu0 0.0
  %376 = vmatprep.subr.mxu0 0.0
  %377 = vmatpush1.msra.mxu0 0.0
  %378 = vmatprep.subr.mxu0 0.0
  %379 = vmatpush1.msra.mxu0 0.0
  %380 = vmatprep.subr.mxu0 0.0
  %381 = vmatpush1.msra.mxu0 0.0
  %382 = vmatprep.mubr.f32.mxu0 0.0
  %383 = vmatmul.mubr.f32.gmra.mrb[0].mxu0 %v316
  %v384 = vpop.f32.mrb[0].mxu0
  %v385 = vadd.f32 0.0, %v384
  %v386 = vpop.f32.mrb[0].mxu0
  %387 = vdwg.mxu0
  %s388 = scalar_lea.vmem %s3, 3
  %v389 = vld [vmem:[%s388] sm:$0x1]
  %v391 = vlaneseq
  %v392 = vshrl.u32 %v391, 7
  %v393 = vsub.s32 0, %v392
  %v394 = vrot.slane %v389, %v393
  %v396 = vmul.f32 %v385, %v394
  %v397 = vadd.f32 %v310, %v396
  %s398 = scalar_lea.vmem %s1, 32
  %v399 = vld [vmem:[%s398] sm:$0xff]
  %v401 = vsel %vm54, %v399, 0
  %403 = vmatprep.subr.mxu0 0.0
  %404 = vmatpush1.msra.mxu0 %v50
  %405 = vmatprep.subr.mxu0 0.0
  %406 = vmatpush1.msra.mxu0 0.0
  %407 = vmatprep.subr.mxu0 0.0
  %408 = vmatpush1.msra.mxu0 0.0
  %409 = vmatprep.subr.mxu0 0.0
  %410 = vmatpush1.msra.mxu0 0.0
  %411 = vmatprep.subr.mxu0 0.0
  %412 = vmatpush1.msra.mxu0 0.0
  %413 = vmatprep.subr.mxu0 0.0
  %414 = vmatpush1.msra.mxu0 0.0
  %415 = vmatprep.subr.mxu0 0.0
  %416 = vmatpush1.msra.mxu0 0.0
  %417 = vmatprep.subr.mxu0 0.0
  %418 = vmatpush1.msra.mxu0 0.0
  %419 = vmatprep.subr.mxu0 0.0
  %420 = vmatpush1.msra.mxu0 0.0
  %421 = vmatprep.subr.mxu0 0.0
  %422 = vmatpush1.msra.mxu0 0.0
  %423 = vmatprep.subr.mxu0 0.0
  %424 = vmatpush1.msra.mxu0 0.0
  %425 = vmatprep.subr.mxu0 0.0
  %426 = vmatpush1.msra.mxu0 0.0
  %427 = vmatprep.subr.mxu0 0.0
  %428 = vmatpush1.msra.mxu0 0.0
  %429 = vmatprep.subr.mxu0 0.0
  %430 = vmatpush1.msra.mxu0 0.0
  %431 = vmatprep.subr.mxu0 0.0
  %432 = vmatpush1.msra.mxu0 0.0
  %433 = vmatprep.subr.mxu0 0.0
  %434 = vmatpush1.msra.mxu0 0.0
  %435 = vmatprep.subr.mxu0 0.0
  %436 = vmatpush1.msra.mxu0 0.0
  %437 = vmatprep.subr.mxu0 0.0
  %438 = vmatpush1.msra.mxu0 0.0
  %439 = vmatprep.subr.mxu0 0.0
  %440 = vmatpush1.msra.mxu0 0.0
  %441 = vmatprep.subr.mxu0 0.0
  %442 = vmatpush1.msra.mxu0 0.0
  %443 = vmatprep.subr.mxu0 0.0
  %444 = vmatpush1.msra.mxu0 0.0
  %445 = vmatprep.subr.mxu0 0.0
  %446 = vmatpush1.msra.mxu0 0.0
  %447 = vmatprep.subr.mxu0 0.0
  %448 = vmatpush1.msra.mxu0 0.0
  %449 = vmatprep.subr.mxu0 0.0
  %450 = vmatpush1.msra.mxu0 0.0
  %451 = vmatprep.subr.mxu0 0.0
  %452 = vmatpush1.msra.mxu0 0.0
  %453 = vmatprep.subr.mxu0 0.0
  %454 = vmatpush1.msra.mxu0 0.0
  %455 = vmatprep.subr.mxu0 0.0
  %456 = vmatpush1.msra.mxu0 0.0
  %457 = vmatprep.subr.mxu0 0.0
  %458 = vmatpush1.msra.mxu0 0.0
  %459 = vmatprep.subr.mxu0 0.0
  %460 = vmatpush1.msra.mxu0 0.0
  %461 = vmatprep.subr.mxu0 0.0
  %462 = vmatpush1.msra.mxu0 0.0
  %463 = vmatprep.subr.mxu0 0.0
  %464 = vmatpush1.msra.mxu0 0.0
  %465 = vmatprep.subr.mxu0 0.0
  %466 = vmatpush1.msra.mxu0 0.0
  %467 = vmatprep.mubr.f32.mxu0 0.0
  %468 = vmatmul.mubr.f32.gmra.mrb[0].mxu0 %v401
  %v469 = vpop.f32.mrb[0].mxu0
  %v470 = vadd.f32 0.0, %v469
  %v471 = vpop.f32.mrb[0].mxu0
  %472 = vdwg.mxu0
  %v473 = vadd.f32 %v397, %v470
  %474 = vrot.lane.b32.xlu0 %v50, 127
  %v475 = vpop.permute.xlu0 %474
  %s476 = scalar_lea.vmem %s1, 40
  %v477 = vld [vmem:[%s476] sm:$0xff]
  %v479 = vsel %vm54, %v477, 0
  %481 = vmatprep.subr.mxu0 0.0
  %482 = vmatpush1.msra.mxu0 %v475
  %483 = vmatprep.subr.mxu0 0.0
  %484 = vmatpush1.msra.mxu0 0.0
  %485 = vmatprep.subr.mxu0 0.0
  %486 = vmatpush1.msra.mxu0 0.0
  %487 = vmatprep.subr.mxu0 0.0
  %488 = vmatpush1.msra.mxu0 0.0
  %489 = vmatprep.subr.mxu0 0.0
  %490 = vmatpush1.msra.mxu0 0.0
  %491 = vmatprep.subr.mxu0 0.0
  %492 = vmatpush1.msra.mxu0 0.0
  %493 = vmatprep.subr.mxu0 0.0
  %494 = vmatpush1.msra.mxu0 0.0
  %495 = vmatprep.subr.mxu0 0.0
  %496 = vmatpush1.msra.mxu0 0.0
  %497 = vmatprep.subr.mxu0 0.0
  %498 = vmatpush1.msra.mxu0 0.0
  %499 = vmatprep.subr.mxu0 0.0
  %500 = vmatpush1.msra.mxu0 0.0
  %501 = vmatprep.subr.mxu0 0.0
  %502 = vmatpush1.msra.mxu0 0.0
  %503 = vmatprep.subr.mxu0 0.0
  %504 = vmatpush1.msra.mxu0 0.0
  %505 = vmatprep.subr.mxu0 0.0
  %506 = vmatpush1.msra.mxu0 0.0
  %507 = vmatprep.subr.mxu0 0.0
  %508 = vmatpush1.msra.mxu0 0.0
  %509 = vmatprep.subr.mxu0 0.0
  %510 = vmatpush1.msra.mxu0 0.0
  %511 = vmatprep.subr.mxu0 0.0
  %512 = vmatpush1.msra.mxu0 0.0
  %513 = vmatprep.subr.mxu0 0.0
  %514 = vmatpush1.msra.mxu0 0.0
  %515 = vmatprep.subr.mxu0 0.0
  %516 = vmatpush1.msra.mxu0 0.0
  %517 = vmatprep.subr.mxu0 0.0
  %518 = vmatpush1.msra.mxu0 0.0
  %519 = vmatprep.subr.mxu0 0.0
  %520 = vmatpush1.msra.mxu0 0.0
  %521 = vmatprep.subr.mxu0 0.0
  %522 = vmatpush1.msra.mxu0 0.0
  %523 = vmatprep.subr.mxu0 0.0
  %524 = vmatpush1.msra.mxu0 0.0
  %525 = vmatprep.subr.mxu0 0.0
  %526 = vmatpush1.msra.mxu0 0.0
  %527 = vmatprep.subr.mxu0 0.0
  %528 = vmatpush1.msra.mxu0 0.0
  %529 = vmatprep.subr.mxu0 0.0
  %530 = vmatpush1.msra.mxu0 0.0
  %531 = vmatprep.subr.mxu0 0.0
  %532 = vmatpush1.msra.mxu0 0.0
  %533 = vmatprep.subr.mxu0 0.0
  %534 = vmatpush1.msra.mxu0 0.0
  %535 = vmatprep.subr.mxu0 0.0
  %536 = vmatpush1.msra.mxu0 0.0
  %537 = vmatprep.subr.mxu0 0.0
  %538 = vmatpush1.msra.mxu0 0.0
  %539 = vmatprep.subr.mxu0 0.0
  %540 = vmatpush1.msra.mxu0 0.0
  %541 = vmatprep.subr.mxu0 0.0
  %542 = vmatpush1.msra.mxu0 0.0
  %543 = vmatprep.subr.mxu0 0.0
  %544 = vmatpush1.msra.mxu0 0.0
  %545 = vmatprep.mubr.f32.mxu0 0.0
  %546 = vmatmul.mubr.f32.gmra.mrb[0].mxu0 %v479
  %v547 = vpop.f32.mrb[0].mxu0
  %v548 = vadd.f32 0.0, %v547
  %v549 = vpop.f32.mrb[0].mxu0
  %550 = vdwg.mxu0
  %s551 = scalar_lea.vmem %s3, 5
  %v552 = vld [vmem:[%s551] sm:$0x1]
  %v554 = vlaneseq
  %v555 = vshrl.u32 %v554, 7
  %v556 = vsub.s32 0, %v555
  %v557 = vrot.slane %v552, %v556
  %v559 = vmul.f32 %v548, %v557
  %v560 = vadd.f32 %v473, %v559
  %561 = vrot.lane.b32.xlu0 %v50, 121
  %v562 = vpop.permute.xlu0 %561
  %s563 = scalar_lea.vmem %s1, 48
  %v564 = vld [vmem:[%s563] sm:$0xff]
  %v566 = vsel %vm54, %v564, 0
  %568 = vmatprep.subr.mxu0 0.0
  %569 = vmatpush1.msra.mxu0 %v562
  %570 = vmatprep.subr.mxu0 0.0
  %571 = vmatpush1.msra.mxu0 0.0
  %572 = vmatprep.subr.mxu0 0.0
  %573 = vmatpush1.msra.mxu0 0.0
  %574 = vmatprep.subr.mxu0 0.0
  %575 = vmatpush1.msra.mxu0 0.0
  %576 = vmatprep.subr.mxu0 0.0
  %577 = vmatpush1.msra.mxu0 0.0
  %578 = vmatprep.subr.mxu0 0.0
  %579 = vmatpush1.msra.mxu0 0.0
  %580 = vmatprep.subr.mxu0 0.0
  %581 = vmatpush1.msra.mxu0 0.0
  %582 = vmatprep.subr.mxu0 0.0
  %583 = vmatpush1.msra.mxu0 0.0
  %584 = vmatprep.subr.mxu0 0.0
  %585 = vmatpush1.msra.mxu0 0.0
  %586 = vmatprep.subr.mxu0 0.0
  %587 = vmatpush1.msra.mxu0 0.0
  %588 = vmatprep.subr.mxu0 0.0
  %589 = vmatpush1.msra.mxu0 0.0
  %590 = vmatprep.subr.mxu0 0.0
  %591 = vmatpush1.msra.mxu0 0.0
  %592 = vmatprep.subr.mxu0 0.0
  %593 = vmatpush1.msra.mxu0 0.0
  %594 = vmatprep.subr.mxu0 0.0
  %595 = vmatpush1.msra.mxu0 0.0
  %596 = vmatprep.subr.mxu0 0.0
  %597 = vmatpush1.msra.mxu0 0.0
  %598 = vmatprep.subr.mxu0 0.0
  %599 = vmatpush1.msra.mxu0 0.0
  %600 = vmatprep.subr.mxu0 0.0
  %601 = vmatpush1.msra.mxu0 0.0
  %602 = vmatprep.subr.mxu0 0.0
  %603 = vmatpush1.msra.mxu0 0.0
  %604 = vmatprep.subr.mxu0 0.0
  %605 = vmatpush1.msra.mxu0 0.0
  %606 = vmatprep.subr.mxu0 0.0
  %607 = vmatpush1.msra.mxu0 0.0
  %608 = vmatprep.subr.mxu0 0.0
  %609 = vmatpush1.msra.mxu0 0.0
  %610 = vmatprep.subr.mxu0 0.0
  %611 = vmatpush1.msra.mxu0 0.0
  %612 = vmatprep.subr.mxu0 0.0
  %613 = vmatpush1.msra.mxu0 0.0
  %614 = vmatprep.subr.mxu0 0.0
  %615 = vmatpush1.msra.mxu0 0.0
  %616 = vmatprep.subr.mxu0 0.0
  %617 = vmatpush1.msra.mxu0 0.0
  %618 = vmatprep.subr.mxu0 0.0
  %619 = vmatpush1.msra.mxu0 0.0
  %620 = vmatprep.subr.mxu0 0.0
  %621 = vmatpush1.msra.mxu0 0.0
  %622 = vmatprep.subr.mxu0 0.0
  %623 = vmatpush1.msra.mxu0 0.0
  %624 = vmatprep.subr.mxu0 0.0
  %625 = vmatpush1.msra.mxu0 0.0
  %626 = vmatprep.subr.mxu0 0.0
  %627 = vmatpush1.msra.mxu0 0.0
  %628 = vmatprep.subr.mxu0 0.0
  %629 = vmatpush1.msra.mxu0 0.0
  %630 = vmatprep.subr.mxu0 0.0
  %631 = vmatpush1.msra.mxu0 0.0
  %632 = vmatprep.mubr.f32.mxu0 0.0
  %633 = vmatmul.mubr.f32.gmra.mrb[0].mxu0 %v566
  %v634 = vpop.f32.mrb[0].mxu0
  %v635 = vadd.f32 0.0, %v634
  %v636 = vpop.f32.mrb[0].mxu0
  %637 = vdwg.mxu0
  %s638 = scalar_lea.vmem %s3, 6
  %v639 = vld [vmem:[%s638] sm:$0x1]
  %v641 = vlaneseq
  %v642 = vshrl.u32 %v641, 7
  %v643 = vsub.s32 0, %v642
  %v644 = vrot.slane %v639, %v643
  %v646 = vmul.f32 %v635, %v644
  %v647 = vadd.f32 %v560, %v646
  %648 = vrot.lane.b32.xlu0 %v50, 120
  %v649 = vpop.permute.xlu0 %648
  %s650 = scalar_lea.vmem %s1, 56
  %v651 = vld [vmem:[%s650] sm:$0xff]
  %v653 = vsel %vm54, %v651, 0
  %655 = vmatprep.subr.mxu0 0.0
  %656 = vmatpush1.msra.mxu0 %v649
  %657 = vmatprep.subr.mxu0 0.0
  %658 = vmatpush1.msra.mxu0 0.0
  %659 = vmatprep.subr.mxu0 0.0
  %660 = vmatpush1.msra.mxu0 0.0
  %661 = vmatprep.subr.mxu0 0.0
  %662 = vmatpush1.msra.mxu0 0.0
  %663 = vmatprep.subr.mxu0 0.0
  %664 = vmatpush1.msra.mxu0 0.0
  %665 = vmatprep.subr.mxu0 0.0
  %666 = vmatpush1.msra.mxu0 0.0
  %667 = vmatprep.subr.mxu0 0.0
  %668 = vmatpush1.msra.mxu0 0.0
  %669 = vmatprep.subr.mxu0 0.0
  %670 = vmatpush1.msra.mxu0 0.0
  %671 = vmatprep.subr.mxu0 0.0
  %672 = vmatpush1.msra.mxu0 0.0
  %673 = vmatprep.subr.mxu0 0.0
  %674 = vmatpush1.msra.mxu0 0.0
  %675 = vmatprep.subr.mxu0 0.0
  %676 = vmatpush1.msra.mxu0 0.0
  %677 = vmatprep.subr.mxu0 0.0
  %678 = vmatpush1.msra.mxu0 0.0
  %679 = vmatprep.subr.mxu0 0.0
  %680 = vmatpush1.msra.mxu0 0.0
  %681 = vmatprep.subr.mxu0 0.0
  %682 = vmatpush1.msra.mxu0 0.0
  %683 = vmatprep.subr.mxu0 0.0
  %684 = vmatpush1.msra.mxu0 0.0
  %685 = vmatprep.subr.mxu0 0.0
  %686 = vmatpush1.msra.mxu0 0.0
  %687 = vmatprep.subr.mxu0 0.0
  %688 = vmatpush1.msra.mxu0 0.0
  %689 = vmatprep.subr.mxu0 0.0
  %690 = vmatpush1.msra.mxu0 0.0
  %691 = vmatprep.subr.mxu0 0.0
  %692 = vmatpush1.msra.mxu0 0.0
  %693 = vmatprep.subr.mxu0 0.0
  %694 = vmatpush1.msra.mxu0 0.0
  %695 = vmatprep.subr.mxu0 0.0
  %696 = vmatpush1.msra.mxu0 0.0
  %697 = vmatprep.subr.mxu0 0.0
  %698 = vmatpush1.msra.mxu0 0.0
  %699 = vmatprep.subr.mxu0 0.0
  %700 = vmatpush1.msra.mxu0 0.0
  %701 = vmatprep.subr.mxu0 0.0
  %702 = vmatpush1.msra.mxu0 0.0
  %703 = vmatprep.subr.mxu0 0.0
  %704 = vmatpush1.msra.mxu0 0.0
  %705 = vmatprep.subr.mxu0 0.0
  %706 = vmatpush1.msra.mxu0 0.0
  %707 = vmatprep.subr.mxu0 0.0
  %708 = vmatpush1.msra.mxu0 0.0
  %709 = vmatprep.subr.mxu0 0.0
  %710 = vmatpush1.msra.mxu0 0.0
  %711 = vmatprep.subr.mxu0 0.0
  %712 = vmatpush1.msra.mxu0 0.0
  %713 = vmatprep.subr.mxu0 0.0
  %714 = vmatpush1.msra.mxu0 0.0
  %715 = vmatprep.subr.mxu0 0.0
  %716 = vmatpush1.msra.mxu0 0.0
  %717 = vmatprep.subr.mxu0 0.0
  %718 = vmatpush1.msra.mxu0 0.0
  %719 = vmatprep.mubr.f32.mxu0 0.0
  %720 = vmatmul.mubr.f32.gmra.mrb[0].mxu0 %v653
  %v721 = vpop.f32.mrb[0].mxu0
  %v722 = vadd.f32 0.0, %v721
  %v723 = vpop.f32.mrb[0].mxu0
  %724 = vdwg.mxu0
  %s725 = scalar_lea.vmem %s3, 7
  %v726 = vld [vmem:[%s725] sm:$0x1]
  %v728 = vlaneseq
  %v729 = vshrl.u32 %v728, 7
  %v730 = vsub.s32 0, %v729
  %v731 = vrot.slane %v726, %v730
  %v733 = vmul.f32 %v722, %v731
  %v734 = vadd.f32 %v647, %v733
  %735 = vrot.lane.b32.xlu0 %v50, 119
  %v736 = vpop.permute.xlu0 %735
  %s737 = scalar_lea.vmem %s1, 64
  %v738 = vld [vmem:[%s737] sm:$0xff]
  %v740 = vsel %vm54, %v738, 0
  %742 = vmatprep.subr.mxu0 0.0
  %743 = vmatpush1.msra.mxu0 %v736
  %744 = vmatprep.subr.mxu0 0.0
  %745 = vmatpush1.msra.mxu0 0.0
  %746 = vmatprep.subr.mxu0 0.0
  %747 = vmatpush1.msra.mxu0 0.0
  %748 = vmatprep.subr.mxu0 0.0
  %749 = vmatpush1.msra.mxu0 0.0
  %750 = vmatprep.subr.mxu0 0.0
  %751 = vmatpush1.msra.mxu0 0.0
  %752 = vmatprep.subr.mxu0 0.0
  %753 = vmatpush1.msra.mxu0 0.0
  %754 = vmatprep.subr.mxu0 0.0
  %755 = vmatpush1.msra.mxu0 0.0
  %756 = vmatprep.subr.mxu0 0.0
  %757 = vmatpush1.msra.mxu0 0.0
  %758 = vmatprep.subr.mxu0 0.0
  %759 = vmatpush1.msra.mxu0 0.0
  %760 = vmatprep.subr.mxu0 0.0
  %761 = vmatpush1.msra.mxu0 0.0
  %762 = vmatprep.subr.mxu0 0.0
  %763 = vmatpush1.msra.mxu0 0.0
  %764 = vmatprep.subr.mxu0 0.0
  %765 = vmatpush1.msra.mxu0 0.0
  %766 = vmatprep.subr.mxu0 0.0
  %767 = vmatpush1.msra.mxu0 0.0
  %768 = vmatprep.subr.mxu0 0.0
  %769 = vmatpush1.msra.mxu0 0.0
  %770 = vmatprep.subr.mxu0 0.0
  %771 = vmatpush1.msra.mxu0 0.0
  %772 = vmatprep.subr.mxu0 0.0
  %773 = vmatpush1.msra.mxu0 0.0
  %774 = vmatprep.subr.mxu0 0.0
  %775 = vmatpush1.msra.mxu0 0.0
  %776 = vmatprep.subr.mxu0 0.0
  %777 = vmatpush1.msra.mxu0 0.0
  %778 = vmatprep.subr.mxu0 0.0
  %779 = vmatpush1.msra.mxu0 0.0
  %780 = vmatprep.subr.mxu0 0.0
  %781 = vmatpush1.msra.mxu0 0.0
  %782 = vmatprep.subr.mxu0 0.0
  %783 = vmatpush1.msra.mxu0 0.0
  %784 = vmatprep.subr.mxu0 0.0
  %785 = vmatpush1.msra.mxu0 0.0
  %786 = vmatprep.subr.mxu0 0.0
  %787 = vmatpush1.msra.mxu0 0.0
  %788 = vmatprep.subr.mxu0 0.0
  %789 = vmatpush1.msra.mxu0 0.0
  %790 = vmatprep.subr.mxu0 0.0
  %791 = vmatpush1.msra.mxu0 0.0
  %792 = vmatprep.subr.mxu0 0.0
  %793 = vmatpush1.msra.mxu0 0.0
  %794 = vmatprep.subr.mxu0 0.0
  %795 = vmatpush1.msra.mxu0 0.0
  %796 = vmatprep.subr.mxu0 0.0
  %797 = vmatpush1.msra.mxu0 0.0
  %798 = vmatprep.subr.mxu0 0.0
  %799 = vmatpush1.msra.mxu0 0.0
  %800 = vmatprep.subr.mxu0 0.0
  %801 = vmatpush1.msra.mxu0 0.0
  %802 = vmatprep.subr.mxu0 0.0
  %803 = vmatpush1.msra.mxu0 0.0
  %804 = vmatprep.subr.mxu0 0.0
  %805 = vmatpush1.msra.mxu0 0.0
  %806 = vmatprep.mubr.f32.mxu0 0.0
  %807 = vmatmul.mubr.f32.gmra.mrb[0].mxu0 %v740
  %v808 = vpop.f32.mrb[0].mxu0
  %v809 = vadd.f32 0.0, %v808
  %v810 = vpop.f32.mrb[0].mxu0
  %811 = vdwg.mxu0
  %s812 = scalar_lea.vmem %s3, 8
  %v813 = vld [vmem:[%s812] sm:$0x1]
  %v815 = vlaneseq
  %v816 = vshrl.u32 %v815, 7
  %v817 = vsub.s32 0, %v816
  %v818 = vrot.slane %v813, %v817
  %v820 = vmul.f32 %v809, %v818
  %v821 = vadd.f32 %v734, %v820
  %v822 = vld [vmem:[%s2] sm:$0xff]
  %824 = vset.pattern.permute.xlu0 0
  %825 = vperm.xlu0 %824, %v822
  %v826 = vpop.permute.xlu0 %825
  %v828 = vadd.f32 %v821, %v826
  %v829 = vpack.c.bf16 %v828, %v828
  %830 = vst [vmem:[%s7] sm:$0xf] %v829
  %831 = vadd.xlane.f32.xlu0 %v828
  %v832 = vpop.xlane.xlu0 %831
  %vm833 = vcmask 7168
  %834 = vst.msk [vmem:[%s8] sm:$0xff] %vm833, %v832
  %v835 = vmul.f32 %v828, %v828
  %836 = vadd.xlane.f32.xlu0 %v835
  %v837 = vpop.xlane.xlu0 %836
  %838 = vst.msk [vmem:[%s9] sm:$0xff] %vm833, %v837
  // Predicated region
  $region30: #{event_encoder_forward.4} parent=0 // pred_check
    _
  $region31: #{event_encoder_forward.4} parent=0 // pred_check_branch
    %840 = sbr.rel (0) target = $region33
  $region32: #{event_encoder_forward.4} parent=0 // pred_region
    _
  $region33: #{event_encoder_forward.4} parent=0 // pred_fallthru
    _
  // Predicated region
  $region34: #{event_encoder_forward.4} parent=0 // pred_check
    _
  $region35: #{event_encoder_forward.4} parent=0 // pred_check_branch
    %842 = sbr.rel (0) target = $region37
  $region36: #{event_encoder_forward.4} parent=0 // pred_region
    _
  $region37: #{event_encoder_forward.4} parent=0 // pred_fallthru
    _
  // Predicated region
  $region38: #{event_encoder_forward.4} parent=0 // pred_check
    _
  $region39: #{event_encoder_forward.4} parent=0 // pred_check_branch
    %844 = sbr.rel (0) target = $region41
  $region40: #{event_encoder_forward.4} parent=0 // pred_region
    _
  $region41: #{event_encoder_forward.4} parent=0 // pred_fallthru
    _
  // Predicated region
  $region42: #{event_encoder_forward.4} parent=0 // pred_check
    _
  $region43: #{event_encoder_forward.4} parent=0 // pred_check_branch
    %846 = sbr.rel (0) target = $region45
  $region44: #{event_encoder_forward.4} parent=0 // pred_region
    _
  $region45: #{event_encoder_forward.4} parent=0 // pred_fallthru
    _
  // Predicated region
  $region46: #{event_encoder_forward.4} parent=0 // pred_check
    _
  $region47: #{event_encoder_forward.4} parent=0 // pred_check_branch
    %848 = sbr.rel (0) target = $region49
  $region48: #{event_encoder_forward.4} parent=0 // pred_region
    _
  $region49: #{event_encoder_forward.4} parent=0 // pred_fallthru
    _
  // Predicated region
  $region50: #{event_encoder_forward.4} parent=0 // pred_check
    _
  $region51: #{event_encoder_forward.4} parent=0 // pred_check_branch
    %850 = sbr.rel (0) target = $region53
  $region52: #{event_encoder_forward.4} parent=0 // pred_region
    _
  $region53: #{event_encoder_forward.4} parent=0 // pred_fallthru
    _

</llo_original>
